<compile_context>
chip_gen: v6e
topology: v6e:2x2x1
jax: 0.10.0
libtpu: 0.0.40
codegen_flags: <defaults>
</compile_context>

<pallas_src>
import functools
import numpy as np

import jax
import jax.numpy as jnp
from jax.experimental import pallas as pl
from jax.experimental.pallas import tpu as pltpu

EPS = 1e-5
MASK_VALUE = -1e9   # finite "masked" value; exp() underflows to 0 exactly


# ----------------------------- sizing helpers --------------------------------

def _round_down(x, m):
    return max(m, (x // m) * m)


def _vmem_budgets():
    """Generation-aware VMEM sizing budget + compiler scoped-VMEM limit."""
    try:
        cap = int(pltpu.get_tpu_info().vmem_capacity_bytes)
    except Exception:
        cap = 64 << 20                      # conservative (v7x-sized) fallback
    budget = int(min(cap * 3 // 4, 96 << 20))          # ~48 MiB v7x, ~96 MiB v5e/v6e
    limit = int(min(cap - (8 << 20), budget * 5 // 4, 112 << 20))
    limit = max(limit, budget)
    return budget, limit


@functools.lru_cache(maxsize=None)
def _single_buffer_mode():
    """Probe pl.Buffered(1) support for grid-constant (broadcast) operands.

    Broadcast weight blocks never change across the grid, so double-buffering
    them only doubles their VMEM cost (w1+w2 alone can blow v7x's 64 MiB at
    real Swin sizes).  Returns pl.Buffered(1) if the installed Pallas lowers
    it and produces correct numbers, else None (default double-buffering).
    """
    try:
        def k(w_ref, o_ref):
            o_ref[...] = w_ref[...] * 2.0
        x = jnp.arange(8 * 128, dtype=jnp.float32).reshape(8, 128)
        out = pl.pallas_call(
            k,
            out_shape=jax.ShapeDtypeStruct((16, 128), jnp.float32),
            grid=(2,),
            in_specs=[pl.BlockSpec((8, 128), lambda i: (0, 0),
                                   pipeline_mode=pl.Buffered(1))],
            out_specs=pl.BlockSpec((8, 128), lambda i: (i, 0)),
        )(x)
        np.testing.assert_allclose(np.asarray(out),
                                   np.tile(np.asarray(x) * 2.0, (2, 1)))
        return pl.Buffered(1)
    except Exception:
        return None


def _bcast_spec(shape):
    """BlockSpec for a grid-constant operand (whole array, single-buffered)."""
    nd = len(shape)
    idx = lambda i, _nd=nd: (0,) * _nd
    mode = _single_buffer_mode()
    if mode is not None:
        return pl.BlockSpec(shape, idx, pipeline_mode=mode)
    return pl.BlockSpec(shape, idx)


def _pick_window_block(nw, total_windows, s, dim, inner, esz, budget, fixed_bytes):
    """Largest divisor of NW whose fused-attention working set fits the VMEM
    budget, preferring >= 2 grid steps (megacore / pipeline overlap)."""
    avail = max(budget - fixed_bytes, 1 << 20)

    def fits(wb):
        r = wb * s
        io = 2 * 2 * r * dim * esz              # x + out blocks, double-buffered
        bias = 2 * wb * s * s * 4               # bias block, double-buffered (f32)
        tmp = (r * dim * 4                      # normalized activations (f32)
               + r * 3 * inner * (4 + esz)      # qkv: f32 accumulator + cdtype copy
               + 3 * wb * s * s * 4             # scores / exp / probs (f32)
               + r * dim * 4)                   # fused out-proj accumulator (f32)
        return io + bias + tmp <= avail

    divisors = [wb for wb in range(1, nw + 1) if nw % wb == 0 and fits(wb)]
    if not divisors:
        return 1
    multi_step = [wb for wb in divisors if total_windows // wb >= 2]
    return max(multi_step) if multi_step else max(divisors)


def _pick_row_tile(n_rows, dim, mlp_dim, esz, budget, fixed_bytes):
    """Largest row tile for the MLP kernel that fits the VMEM budget, capped
    so large problems keep >= ~8 grid steps (both v7x TCs + pipeline)."""
    avail = max(budget - fixed_bytes, 1 << 20)
    per_row = (2 * 2 * dim * esz                # x + out blocks, double-buffered
               + dim * 4                        # normalized activations (f32)
               + mlp_dim * (4 + 4 + esz)        # hidden f32 + GELU temps + cdtype copy
               + dim * 4)                       # output accumulator (f32)
    tm = avail // per_row
    tm = min(tm, max(256, n_rows // 8))         # keep the grid busy at large N
    tm = int(min(n_rows, 1024, max(8, tm)))
    if tm < n_rows:
        tm = _round_down(tm, 8)
    return tm


# ----------------------------- in-kernel math --------------------------------

def _layernorm_f32(x_f32, g_f32, b_f32):
    mean = jnp.mean(x_f32, axis=-1, keepdims=True)
    var = jnp.mean(jnp.square(x_f32 - mean), axis=-1, keepdims=True)
    return (x_f32 - mean) * jax.lax.rsqrt(var + EPS) * g_f32 + b_f32


def _erf(x):
    # Abramowitz & Stegun 7.1.26 rational approx, |err| <~ 1.5e-7 in f32.
    # Kept instead of lax.erf to guarantee a clean Mosaic lowering.
    a1, a2, a3, a4, a5 = 0.254829592, -0.284496736, 1.421413741, -1.453152027, 1.061405429
    p = 0.3275911
    s = jnp.where(x >= 0.0, 1.0, -1.0)
    ax = jnp.abs(x)
    t = 1.0 / (1.0 + p * ax)
    poly = ((((a5 * t + a4) * t + a3) * t + a2) * t + a1) * t
    return s * (1.0 - poly * jnp.exp(-ax * ax))


# ----------------------------- Pallas kernels --------------------------------

def attn_block_kernel(x_ref, g_ref, b_ref, wqkv_ref, bias_ref, wout_ref, bout_ref,
                      o_ref, *, heads, head_dim):
    """Fused LN1 + QKV + windowed multi-head attention + out-proj + residual.

    x_ref   : (W_BLK, S, dim)   tokens in (shifted) window order
    wqkv_ref: (dim, 3*inner)    Q columns pre-scaled by head_dim**-0.5
    bias_ref: (W_BLK, S, S)     pre-combined pos-bias + shift mask (f32)
    wout_ref: (heads, head_dim, dim)
    bout_ref: (1, dim)
    o_ref   : (W_BLK, S, dim)   lane-dense (model-dim wide) output
    """
    wb, s, dim = x_ref.shape
    inner = heads * head_dim
    rows = wb * s

    x = x_ref[...]                                   # compute dtype (f32 / bf16)
    cdt = x.dtype
    xr = x.reshape(rows, dim)
    # LN statistics in f32, normalized activations back to compute dtype so the
    # MXU sees native-width operands (single pass for bf16).
    xn = _layernorm_f32(xr.astype(jnp.float32),
                        g_ref[...].astype(jnp.float32),
                        b_ref[...].astype(jnp.float32)).astype(cdt)

    # One wide QKV matmul (full MXU width); f32 accumulation, cast back.
    qkv = jnp.dot(xn, wqkv_ref[...],
                  preferred_element_type=jnp.float32).astype(cdt)
    qkv = qkv.reshape(wb, s, 3 * inner)

    bias = bias_ref[...].astype(jnp.float32)         # (W, S, S)
    y_acc = jnp.zeros((rows, dim), jnp.float32)

    # TODO(synk): fold the head loop into one (W_BLK*heads)-batched einsum once
    # Mosaic reliably supports the non-minor (W,S,H,D)->(W,H,S,D) transpose;
    # meanwhile heads are unrolled, but the lane-concatenate of head outputs and
    # the separate out-projection are gone: the out-projection is accumulated
    # per head (concat_h(o_h) @ W_out == sum_h o_h @ W_out[h]).
    for h in range(heads):
        lo = h * head_dim
        q = qkv[:, :, lo:lo + head_dim]                              # pre-scaled
        k = qkv[:, :, inner + lo:inner + lo + head_dim]
        v = qkv[:, :, 2 * inner + lo:2 * inner + lo + head_dim]
        dots = jnp.einsum("wid,wjd->wij", q, k,
                          preferred_element_type=jnp.float32) + bias
        dots = dots - jnp.max(dots, axis=-1, keepdims=True)
        e = jnp.exp(dots)
        p = (e * pl.reciprocal(jnp.sum(e, axis=-1, keepdims=True),
                               approx=True)).astype(cdt)
        o_h = jnp.einsum("wij,wjd->wid", p, v,
                         preferred_element_type=jnp.float32)
        y_acc = y_acc + jnp.dot(o_h.reshape(rows, head_dim).astype(cdt),
                                wout_ref[h],
                                preferred_element_type=jnp.float32)

    y = y_acc + bout_ref[...].astype(jnp.float32) + xr.astype(jnp.float32)
    o_ref[...] = y.reshape(wb, s, dim).astype(o_ref.dtype)


def mlp_block_kernel(x_ref, g_ref, b_ref, w1_ref, b1_ref, w2_ref, b2_ref, o_ref):
    """Fused LN2 + Linear + GELU + Linear + residual on a row block.

    Padded rows of the last block compute garbage LN statistics whose writes
    are dropped — fine because everything here is strictly row-wise.
    """
    x = x_ref[...]
    cdt = x.dtype
    xn = _layernorm_f32(x.astype(jnp.float32),
                        g_ref[...].astype(jnp.float32),
                        b_ref[...].astype(jnp.float32)).astype(cdt)
    h = jnp.dot(xn, w1_ref[...], preferred_element_type=jnp.float32)
    h = h + b1_ref[...].astype(jnp.float32)
    h = 0.5 * h * (1.0 + _erf(h * 0.7071067811865476))   # exact-erf GELU (torch default)
    y = jnp.dot(h.astype(cdt), w2_ref[...], preferred_element_type=jnp.float32)
    y = y + b2_ref[...].astype(jnp.float32) + x.astype(jnp.float32)
    o_ref[...] = y.astype(o_ref.dtype)


# ----------------------------- pallas_call wrappers --------------------------

def attention_block_pallas(x_win_flat, p, cfg, *, vmem_budget, vmem_limit):
    total_w, s, dim = x_win_flat.shape
    heads, head_dim = cfg["heads"], cfg["head_dim"]
    inner = heads * head_dim
    attn_bias = p["attn_bias"]
    nw = attn_bias.shape[0]
    esz = x_win_flat.dtype.itemsize
    psz = p["w_qkv_s"].dtype.itemsize

    fixed = (dim * 3 * inner + inner * dim + 4 * dim) * psz   # single-buffered weights
    w_blk = _pick_window_block(nw, total_w, s, dim, inner, esz, vmem_budget, fixed)
    n_bias_blocks = nw // w_blk
    if n_bias_blocks == 1:
        bias_idx = lambda i: (0, 0, 0)
    else:
        bias_idx = lambda i: (i % n_bias_blocks, 0, 0)

    n_tokens = total_w * s
    flops = (2 * n_tokens * dim * 3 * inner
             + 4 * total_w * heads * s * s * head_dim
             + 2 * n_tokens * inner * dim)
    cost = pl.CostEstimate(
        flops=int(flops),
        transcendentals=int(total_w * heads * s * s),
        bytes_accessed=int(2 * n_tokens * dim * esz + nw * s * s * 4 + fixed))

    kern = functools.partial(attn_block_kernel, heads=heads, head_dim=head_dim)
    return pl.pallas_call(
        kern,
        out_shape=jax.ShapeDtypeStruct((total_w, s, dim), x_win_flat.dtype),
        grid=(total_w // w_blk,),
        in_specs=[
            pl.BlockSpec((w_blk, s, dim), lambda i: (i, 0, 0)),
            _bcast_spec(p["ln1_g"].shape),
            _bcast_spec(p["ln1_b"].shape),
            _bcast_spec(p["w_qkv_s"].shape),
            pl.BlockSpec((w_blk, s, s), bias_idx),
            _bcast_spec(p["w_out3"].shape),
            _bcast_spec(p["b_out"].shape),
        ],
        out_specs=pl.BlockSpec((w_blk, s, dim), lambda i: (i, 0, 0)),
        compiler_params=pltpu.CompilerParams(
            dimension_semantics=("parallel",),
            vmem_limit_bytes=vmem_limit),
        cost_estimate=cost,
    )(x_win_flat, p["ln1_g"], p["ln1_b"], p["w_qkv_s"], attn_bias,
      p["w_out3"], p["b_out"])


def mlp_block_pallas(x_rows, p, cfg, *, vmem_budget, vmem_limit):
    n, dim = x_rows.shape
    mlp_dim = cfg["mlp_dim"]
    esz = x_rows.dtype.itemsize
    psz = p["w1"].dtype.itemsize

    fixed = (2 * dim * mlp_dim + mlp_dim + 3 * dim) * psz     # single-buffered weights
    tm = _pick_row_tile(n, dim, mlp_dim, esz, vmem_budget, fixed)

    cost = pl.CostEstimate(
        flops=int(4 * n * dim * mlp_dim),
        transcendentals=int(n * mlp_dim),
        bytes_accessed=int(2 * n * dim * esz + fixed))

    return pl.pallas_call(
        mlp_block_kernel,
        out_shape=jax.ShapeDtypeStruct((n, dim), x_rows.dtype),
        grid=(pl.cdiv(n, tm),),
        in_specs=[
            pl.BlockSpec((tm, dim), lambda i: (i, 0)),
            _bcast_spec(p["ln2_g"].shape),
            _bcast_spec(p["ln2_b"].shape),
            _bcast_spec(p["w1"].shape),
            _bcast_spec(p["b1"].shape),
            _bcast_spec(p["w2"].shape),
            _bcast_spec(p["b2"].shape),
        ],
        out_specs=pl.BlockSpec((tm, dim), lambda i: (i, 0)),
        compiler_params=pltpu.CompilerParams(
            dimension_semantics=("parallel",),
            vmem_limit_bytes=vmem_limit),
        cost_estimate=cost,
    )(x_rows, p["ln2_g"], p["ln2_b"], p["w1"], p["b1"], p["w2"], p["b2"])


# ----------------------------- glue helpers ----------------------------------

def window_partition(x, ws):
    # (b, H, W, c) -> (b, NW, S, c), window order (nw_h, nw_w), token order (w_h, w_w)
    b, hh, wwd, c = x.shape
    nwh, nww = hh // ws, wwd // ws
    x = x.reshape(b, nwh, ws, nww, ws, c).transpose(0, 1, 3, 2, 4, 5)
    return x.reshape(b, nwh * nww, ws * ws, c)


def window_unpartition(xw, ws, hh, wwd):
    # (b, NW, S, c) -> (b, H, W, c)
    b, nw, s, c = xw.shape
    nwh, nww = hh // ws, wwd // ws
    x = xw.reshape(b, nwh, nww, ws, ws, c).transpose(0, 1, 3, 2, 4, 5)
    return x.reshape(b, hh, wwd, c)


def create_mask_np(ws, disp, upper_lower, left_right):
    m = np.zeros((ws * ws, ws * ws), np.float32)
    if upper_lower:
        m[-disp * ws:, :-disp * ws] = MASK_VALUE
        m[:-disp * ws, -disp * ws:] = MASK_VALUE
    if left_right:
        m = m.reshape(ws, ws, ws, ws)
        m[:, -disp:, :, :-disp] = MASK_VALUE
        m[:, :-disp, :, -disp:] = MASK_VALUE
        m = m.reshape(ws * ws, ws * ws)
    return m


def init_params(key, cfg, nw_h, nw_w):
    dim, heads, hd = cfg["dim"], cfg["heads"], cfg["head_dim"]
    mlp_dim, ws = cfg["mlp_dim"], cfg["window_size"]
    inner = heads * hd
    scale = hd ** -0.5
    keys = jax.random.split(key, 8)
    p = {
        "ln1_g": jnp.ones((1, dim), jnp.float32),
        "ln1_b": jnp.zeros((1, dim), jnp.float32),
        "ln2_g": jnp.ones((1, dim), jnp.float32),
        "ln2_b": jnp.zeros((1, dim), jnp.float32),
        "w_qkv": jax.random.normal(keys[0], (dim, 3 * inner), jnp.float32) * 0.05,
        "w_out": jax.random.normal(keys[1], (inner, dim), jnp.float32) * 0.05,
        "b_out": jax.random.normal(keys[2], (1, dim), jnp.float32) * 0.05,
        "w1": jax.random.normal(keys[3], (dim, mlp_dim), jnp.float32) * 0.05,
        "b1": jax.random.normal(keys[4], (1, mlp_dim), jnp.float32) * 0.05,
        "w2": jax.random.normal(keys[5], (mlp_dim, dim), jnp.float32) * 0.05,
        "b2": jax.random.normal(keys[6], (1, dim), jnp.float32) * 0.05,
    }
    if cfg["relative_pos_embedding"]:
        pos_emb = jax.random.normal(keys[7], (2 * ws - 1, 2 * ws - 1), jnp.float32)
        idx = np.array([[x, y] for x in range(ws) for y in range(ws)])
        rel = idx[None, :, :] - idx[:, None, :] + ws - 1           # (S, S, 2)
        p["pos_bias"] = pos_emb[rel[:, :, 0], rel[:, :, 1]]        # gather glue
    else:
        p["pos_bias"] = jax.random.normal(keys[7], (ws * ws, ws * ws), jnp.float32)

    S, NW = ws * ws, nw_h * nw_w
    wm = np.zeros((NW, S, S), np.float32)
    if cfg["shifted"]:
        d = ws // 2
        ul = create_mask_np(ws, d, True, False)
        lr = create_mask_np(ws, d, False, True)
        for w in range(NW):
            wh, ww = divmod(w, nw_w)
            if wh == nw_h - 1:
                wm[w] += ul
            if ww == nw_w - 1:
                wm[w] += lr
    p["win_masks"] = jnp.asarray(wm)
    # pre-combined per-window additive bias (single DMA stream in the kernel)
    p["attn_bias"] = p["pos_bias"][None, :, :] + p["win_masks"]

    # Kernel-facing prepared weights (free, setup time):
    #   * softmax scale folded into the Q columns of w_qkv
    #   * w_out pre-split per head -> fused out-projection accumulates per head
    p["w_qkv_s"] = p["w_qkv"].at[:, :inner].multiply(scale)
    p["w_out3"] = p["w_out"].reshape(heads, hd, dim)
    return p


def cast_kernel_params(p, dtype):
    """Cast the kernel-facing weights (activation-path operands) to `dtype`;
    the additive attention bias stays f32."""
    out = dict(p)
    for k in ("w_qkv_s", "w_out3", "w1", "w2",
              "ln1_g", "ln1_b", "ln2_g", "ln2_b", "b_out", "b1", "b2"):
        out[k] = p[k].astype(dtype)
    return out


# ----------------------------- SwinBlock forward ------------------------------

def swin_block_forward(x, p, cfg):
    b, n_h, n_w, dim = x.shape
    ws = cfg["window_size"]
    shifted = cfg["shifted"]
    disp = ws // 2 if shifted else 0
    nw_h, nw_w = n_h // ws, n_w // ws
    NW, S = nw_h * nw_w, ws * ws

    budget, limit = _vmem_budgets()

    # cyclic shift + window partition (token permutations; LN / MLP / residual
    # adds commute with them, so everything stays in the shifted-window frame
    # until the very end).
    xs = jnp.roll(x, (-disp, -disp), axis=(1, 2)) if shifted else x
    x_win = window_partition(xs, ws).reshape(b * NW, S, dim)

    # fused LN1 + QKV + window attention + out-proj + residual
    x1 = attention_block_pallas(x_win, p, cfg,
                                vmem_budget=budget, vmem_limit=limit)

    # fused LN2 + MLP + residual (token-wise, frame-independent)
    x2_rows = mlp_block_pallas(x1.reshape(b * NW * S, dim), p, cfg,
                               vmem_budget=budget, vmem_limit=limit)

    # single un-window + cyclic back-shift at the end
    y = window_unpartition(x2_rows.reshape(b, NW, S, dim), ws, n_h, n_w)
    if shifted:
        y = jnp.roll(y, (disp, disp), axis=(1, 2))
    return y


# ----------------------------- pure-JAX reference -----------------------------

def reference_forward(x, p, cfg):
    ws, heads, hd = cfg["window_size"], cfg["heads"], cfg["head_dim"]
    shifted = cfg["shifted"]
    b, n_h, n_w, dim = x.shape
    inner = heads * hd
    nw_h, nw_w = n_h // ws, n_w // ws
    scale = hd ** -0.5
    disp = ws // 2 if shifted else 0

    def ln(t, g, beta):
        m = jnp.mean(t, -1, keepdims=True)
        v = jnp.mean((t - m) ** 2, -1, keepdims=True)
        return (t - m) / jnp.sqrt(v + EPS) * g.reshape(-1) + beta.reshape(-1)

    t = ln(x, p["ln1_g"], p["ln1_b"])
    if shifted:
        t = jnp.roll(t, (-disp, -disp), (1, 2))
    qkv = t @ p["w_qkv"]
    q, k, v = jnp.split(qkv, 3, axis=-1)

    def win(u):
        u = u.reshape(b, nw_h, ws, nw_w, ws, heads, hd)
        return u.transpose(0, 5, 1, 3, 2, 4, 6).reshape(b, heads, nw_h * nw_w, ws * ws, hd)

    qw, kw, vw = win(q), win(k), win(v)
    dots = jnp.einsum("bhwid,bhwjd->bhwij", qw, kw) * scale
    dots = dots + p["pos_bias"] + p["win_masks"][None, None]
    attn = jax.nn.softmax(dots, axis=-1)
    ow = jnp.einsum("bhwij,bhwjd->bhwid", attn, vw)
    ow = ow.reshape(b, heads, nw_h, nw_w, ws, ws, hd).transpose(0, 2, 4, 3, 5, 1, 6)
    ow = ow.reshape(b, n_h, n_w, inner)
    out = ow @ p["w_out"] + p["b_out"].reshape(-1)
    if shifted:
        out = jnp.roll(out, (disp, disp), (1, 2))
    x1 = out + x

    t2 = ln(x1, p["ln2_g"], p["ln2_b"])
    h = t2 @ p["w1"] + p["b1"].reshape(-1)
    h = 0.5 * h * (1.0 + jax.scipy.special.erf(h / jnp.sqrt(2.0)))
    return h @ p["w2"] + p["b2"].reshape(-1) + x1


# ----------------------------- main -------------------------------------------

if __name__ == "__main__":
    cfg = dict(dim=32, heads=2, head_dim=16, mlp_dim=64,
               shifted=True, window_size=4, relative_pos_embedding=True)
    b, n_h, n_w = 2, 8, 8
    nw_h, nw_w = n_h // cfg["window_size"], n_w // cfg["window_size"]

    key = jax.random.PRNGKey(0)
    kx, kp = jax.random.split(key)
    x = jax.random.normal(kx, (b, n_h, n_w, cfg["dim"]), jnp.float32)
    params = init_params(kp, cfg, nw_h, nw_w)

    out = jax.block_until_ready(swin_block_forward(x, params, cfg))

    ref = reference_forward(x, params, cfg)
    # tolerance covers the EUP approximate-reciprocal softmax normalization,
    # the rational-approx erf GELU and the fused/pre-scaled summation orders.
    np.testing.assert_allclose(np.asarray(out), np.asarray(ref), rtol=1e-3, atol=1e-3)

    # bf16 smoke test of the non-upcast (single-pass MXU) path: same kernels,
    # activations and weights stay bf16, accumulation stays f32.
    xb = x.astype(jnp.bfloat16)
    pb = cast_kernel_params(params, jnp.bfloat16)
    out_bf16 = jax.block_until_ready(swin_block_forward(xb, pb, cfg))
    assert out_bf16.dtype == jnp.bfloat16 and out_bf16.shape == x.shape
    assert bool(jnp.isfinite(out_bf16.astype(jnp.float32)).all())

    print("KERNEL_OK")
</pallas_src>

<mosaic_0001>
module attributes {stable_mosaic.version = 11 : i64} {
  func.func @k(%arg0: i32, %arg1: memref<8x128xf32, #tpu.memory_space<vmem>>, %arg2: memref<8x128xf32, #tpu.memory_space<vmem>>) attributes {dimension_semantics = [#tpu.dimension_semantics<arbitrary>], iteration_bounds = array<i64: 2>, scalar_prefetch = 0 : i64, scratch_operands = 0 : i64, tpu.core_type = #tpu.core_type<tc>, window_params = [{pipeline_mode = #tpu.pipeline_mode<synchronous>, transform_indices = @transform_0, window_bounds = array<i64: 8, 128>}, {transform_indices = @transform_1, window_bounds = array<i64: 8, 128>}]} {
    %c0 = arith.constant 0 : index
    %c0_0 = arith.constant 0 : index
    %0 = vector.load %arg1[%c0, %c0_0] : memref<8x128xf32, #tpu.memory_space<vmem>>, vector<8x128xf32>
    %cst = arith.constant 2.000000e+00 : f32
    %1 = vector.broadcast %cst : f32 to vector<8x128xf32>
    %2 = arith.mulf %0, %1 : vector<8x128xf32>
    %c0_1 = arith.constant 0 : index
    %c0_2 = arith.constant 0 : index
    %3 = vector.load %arg2[%c0_1, %c0_2] : memref<8x128xf32, #tpu.memory_space<vmem>>, vector<8x128xf32>
    tpu.vector_store %arg2[%c0_1, %c0_2], %2 {strides = array<i32>} : memref<8x128xf32, #tpu.memory_space<vmem>>, vector<8x128xf32>,
    return
  }
  func.func @transform_0(%arg0: i32) -> (i32, i32) {
    %c0_i32 = arith.constant 0 : i32
    %c0_i32_0 = arith.constant 0 : i32
    %c0_i32_1 = arith.constant 0 : i32
    return %c0_i32, %c0_i32_0 : i32, i32
  }
  func.func @transform_1(%arg0: i32) -> (i32, i32) {
    %c0_i32 = arith.constant 0 : i32
    %c0_i32_0 = arith.constant 0 : i32
    return %arg0, %c0_i32 : i32, i32
  }
}

module attributes {stable_mosaic.version = 11 : i64} {
  func.func @attn_block_kernel(%arg0: i32, %arg1: memref<4x16x32xf32, #tpu.memory_space<vmem>>, %arg2: memref<1x32xf32, #tpu.memory_space<vmem>>, %arg3: memref<1x32xf32, #tpu.memory_space<vmem>>, %arg4: memref<32x96xf32, #tpu.memory_space<vmem>>, %arg5: memref<4x16x16xf32, #tpu.memory_space<vmem>>, %arg6: memref<2x16x32xf32, #tpu.memory_space<vmem>>, %arg7: memref<1x32xf32, #tpu.memory_space<vmem>>, %arg8: memref<4x16x32xf32, #tpu.memory_space<vmem>>) attributes {dimension_semantics = [#tpu.dimension_semantics<parallel>], iteration_bounds = array<i64: 2>, scalar_prefetch = 0 : i64, scratch_operands = 0 : i64, tpu.core_type = #tpu.core_type<tc>, window_params = [{transform_indices = @transform_0, window_bounds = array<i64: 4, 16, 32>}, {pipeline_mode = #tpu.pipeline_mode<synchronous>, transform_indices = @transform_1, window_bounds = array<i64: 1, 32>}, {pipeline_mode = #tpu.pipeline_mode<synchronous>, transform_indices = @transform_2, window_bounds = array<i64: 1, 32>}, {pipeline_mode = #tpu.pipeline_mode<synchronous>, transform_indices = @transform_3, window_bounds = array<i64: 32, 96>}, {pipeline_mode = #tpu.pipeline_mode<synchronous>, transform_indices = @transform_4, window_bounds = array<i64: 4, 16, 16>}, {pipeline_mode = #tpu.pipeline_mode<synchronous>, transform_indices = @transform_5, window_bounds = array<i64: 2, 16, 32>}, {pipeline_mode = #tpu.pipeline_mode<synchronous>, transform_indices = @transform_6, window_bounds = array<i64: 1, 32>}, {transform_indices = @transform_7, window_bounds = array<i64: 4, 16, 32>}]} {
    %c0 = arith.constant 0 : index
    %c0_0 = arith.constant 0 : index
    %c0_1 = arith.constant 0 : index
    %0 = vector.load %arg1[%c0, %c0_0, %c0_1] : memref<4x16x32xf32, #tpu.memory_space<vmem>>, vector<4x16x32xf32>
    %1 = vector.shape_cast %0 : vector<4x16x32xf32> to vector<64x32xf32>
    %c0_2 = arith.constant 0 : index
    %c0_3 = arith.constant 0 : index
    %2 = vector.load %arg2[%c0_2, %c0_3] : memref<1x32xf32, #tpu.memory_space<vmem>>, vector<1x32xf32>
    %c0_4 = arith.constant 0 : index
    %c0_5 = arith.constant 0 : index
    %3 = vector.load %arg3[%c0_4, %c0_5] : memref<1x32xf32, #tpu.memory_space<vmem>>, vector<1x32xf32>
    %cst = arith.constant dense<0.000000e+00> : vector<64xf32>
    %4 = vector.multi_reduction <add>, %1, %cst [1] : vector<64x32xf32> to vector<64xf32>
    %5 = vector.shape_cast %4 : vector<64xf32> to vector<64x1xf32>
    %cst_6 = arith.constant 3.200000e+01 : f32
    %6 = vector.broadcast %cst_6 : f32 to vector<64x1xf32>
    %7 = arith.divf %5, %6 : vector<64x1xf32>
    %8 = vector.broadcast %7 : vector<64x1xf32> to vector<64x32xf32>
    %9 = arith.subf %1, %8 : vector<64x32xf32>
    %10 = arith.mulf %9, %9 : vector<64x32xf32>
    %cst_7 = arith.constant dense<0.000000e+00> : vector<64xf32>
    %11 = vector.multi_reduction <add>, %10, %cst_7 [1] : vector<64x32xf32> to vector<64xf32>
    %12 = vector.shape_cast %11 : vector<64xf32> to vector<64x1xf32>
    %cst_8 = arith.constant 3.200000e+01 : f32
    %13 = vector.broadcast %cst_8 : f32 to vector<64x1xf32>
    %14 = arith.divf %12, %13 : vector<64x1xf32>
    %15 = vector.broadcast %7 : vector<64x1xf32> to vector<64x32xf32>
    %16 = arith.subf %1, %15 : vector<64x32xf32>
    %cst_9 = arith.constant 9.99999974E-6 : f32
    %17 = vector.broadcast %cst_9 : f32 to vector<64x1xf32>
    %18 = arith.addf %14, %17 : vector<64x1xf32>
    %19 = math.rsqrt %18 : vector<64x1xf32>
    %20 = vector.broadcast %19 : vector<64x1xf32> to vector<64x32xf32>
    %21 = arith.mulf %16, %20 : vector<64x32xf32>
    %22 = vector.broadcast %2 : vector<1x32xf32> to vector<64x32xf32>
    %23 = arith.mulf %21, %22 : vector<64x32xf32>
    %24 = vector.broadcast %3 : vector<1x32xf32> to vector<64x32xf32>
    %25 = arith.addf %23, %24 : vector<64x32xf32>
    %c0_10 = arith.constant 0 : index
    %c0_11 = arith.constant 0 : index
    %26 = vector.load %arg4[%c0_10, %c0_11] : memref<32x96xf32, #tpu.memory_space<vmem>>, vector<32x96xf32>
    %cst_12 = arith.constant dense<0.000000e+00> : vector<64x96xf32>
    %27 = tpu.matmul %25, %26, %cst_12 {dimension_numbers = #tpu.dot_dimension_numbers<[1], [0], [0], [1], [0, 0, 1, 1], [], []>} : vector<64x32xf32>, vector<32x96xf32>, vector<64x96xf32> -> vector<64x96xf32>
    %28 = vector.shape_cast %27 : vector<64x96xf32> to vector<4x16x96xf32>
    %c0_13 = arith.constant 0 : index
    %c0_14 = arith.constant 0 : index
    %c0_15 = arith.constant 0 : index
    %29 = vector.load %arg5[%c0_13, %c0_14, %c0_15] : memref<4x16x16xf32, #tpu.memory_space<vmem>>, vector<4x16x16xf32>
    %cst_16 = arith.constant 0.000000e+00 : f32
    %30 = vector.broadcast %cst_16 : f32 to vector<64x32xf32>
    %31 = vector.extract_strided_slice %28 {offsets = [0, 0, 0], sizes = [4, 16, 16], strides = [1, 1, 1]} : vector<4x16x96xf32> to vector<4x16x16xf32>
    %32 = vector.extract_strided_slice %28 {offsets = [0, 0, 32], sizes = [4, 16, 16], strides = [1, 1, 1]} : vector<4x16x96xf32> to vector<4x16x16xf32>
    %33 = vector.extract_strided_slice %28 {offsets = [0, 0, 64], sizes = [4, 16, 16], strides = [1, 1, 1]} : vector<4x16x96xf32> to vector<4x16x16xf32>
    "tpu.trace_start"() <{level = 10 : i32, message = "wid,wjd->wij"}> : () -> ()
    %cst_17 = arith.constant dense<0.000000e+00> : vector<4x16x16xf32>
    %34 = tpu.matmul %31, %32, %cst_17 {dimension_numbers = #tpu.dot_dimension_numbers<[2], [2], [1], [1], [0, 0, 0, 1, 1, 1], [0], [0]>} : vector<4x16x16xf32>, vector<4x16x16xf32>, vector<4x16x16xf32> -> vector<4x16x16xf32>
    "tpu.trace_stop"() : () -> ()
    %35 = arith.addf %34, %29 : vector<4x16x16xf32>
    %cst_18 = arith.constant dense<0xFF800000> : vector<4x16xf32>
    %36 = vector.multi_reduction <maximumf>, %35, %cst_18 [2] : vector<4x16x16xf32> to vector<4x16xf32>
    %37 = vector.shape_cast %36 : vector<4x16xf32> to vector<4x16x1xf32>
    %38 = vector.broadcast %37 : vector<4x16x1xf32> to vector<4x16x16xf32>
    %39 = arith.subf %35, %38 : vector<4x16x16xf32>
    %40 = math.exp %39 : vector<4x16x16xf32>
    %cst_19 = arith.constant dense<0.000000e+00> : vector<4x16xf32>
    %41 = vector.multi_reduction <add>, %40, %cst_19 [2] : vector<4x16x16xf32> to vector<4x16xf32>
    %42 = vector.shape_cast %41 : vector<4x16xf32> to vector<4x16x1xf32>
    %43 = tpu.reciprocal %42 {approx = true} : vector<4x16x1xf32> -> vector<4x16x1xf32>
    %44 = vector.broadcast %43 : vector<4x16x1xf32> to vector<4x16x16xf32>
    %45 = arith.mulf %40, %44 : vector<4x16x16xf32>
    "tpu.trace_start"() <{level = 10 : i32, message = "wij,wjd->wid"}> : () -> ()
    %cst_20 = arith.constant dense<0.000000e+00> : vector<4x16x16xf32>
    %46 = tpu.matmul %45, %33, %cst_20 {dimension_numbers = #tpu.dot_dimension_numbers<[2], [1], [1], [2], [0, 0, 0, 1, 1, 2], [0], [0]>} : vector<4x16x16xf32>, vector<4x16x16xf32>, vector<4x16x16xf32> -> vector<4x16x16xf32>
    "tpu.trace_stop"() : () -> ()
    %47 = vector.shape_cast %46 : vector<4x16x16xf32> to vector<64x16xf32>
    %c0_21 = arith.constant 0 : index
    %c0_22 = arith.constant 0 : index
    %c0_23 = arith.constant 0 : index
    %48 = vector.load %arg6[%c0_21, %c0_22, %c0_23] : memref<2x16x32xf32, #tpu.memory_space<vmem>>, vector<1x16x32xf32>
    %49 = vector.shape_cast %48 : vector<1x16x32xf32> to vector<16x32xf32>
    %cst_24 = arith.constant dense<0.000000e+00> : vector<64x32xf32>
    %50 = tpu.matmul %47, %49, %cst_24 {dimension_numbers = #tpu.dot_dimension_numbers<[1], [0], [0], [1], [0, 0, 1, 1], [], []>} : vector<64x16xf32>, vector<16x32xf32>, vector<64x32xf32> -> vector<64x32xf32>
    %51 = arith.addf %30, %50 : vector<64x32xf32>
    %52 = vector.extract_strided_slice %28 {offsets = [0, 0, 16], sizes = [4, 16, 16], strides = [1, 1, 1]} : vector<4x16x96xf32> to vector<4x16x16xf32>
    %53 = vector.extract_strided_slice %28 {offsets = [0, 0, 48], sizes = [4, 16, 16], strides = [1, 1, 1]} : vector<4x16x96xf32> to vector<4x16x16xf32>
    %54 = vector.extract_strided_slice %28 {offsets = [0, 0, 80], sizes = [4, 16, 16], strides = [1, 1, 1]} : vector<4x16x96xf32> to vector<4x16x16xf32>
    "tpu.trace_start"() <{level = 10 : i32, message = "wid,wjd->wij"}> : () -> ()
    %cst_25 = arith.constant dense<0.000000e+00> : vector<4x16x16xf32>
    %55 = tpu.matmul %52, %53, %cst_25 {dimension_numbers = #tpu.dot_dimension_numbers<[2], [2], [1], [1], [0, 0, 0, 1, 1, 1], [0], [0]>} : vector<4x16x16xf32>, vector<4x16x16xf32>, vector<4x16x16xf32> -> vector<4x16x16xf32>
    "tpu.trace_stop"() : () -> ()
    %56 = arith.addf %55, %29 : vector<4x16x16xf32>
    %cst_26 = arith.constant dense<0xFF800000> : vector<4x16xf32>
    %57 = vector.multi_reduction <maximumf>, %56, %cst_26 [2] : vector<4x16x16xf32> to vector<4x16xf32>
    %58 = vector.shape_cast %57 : vector<4x16xf32> to vector<4x16x1xf32>
    %59 = vector.broadcast %58 : vector<4x16x1xf32> to vector<4x16x16xf32>
    %60 = arith.subf %56, %59 : vector<4x16x16xf32>
    %61 = math.exp %60 : vector<4x16x16xf32>
    %cst_27 = arith.constant dense<0.000000e+00> : vector<4x16xf32>
    %62 = vector.multi_reduction <add>, %61, %cst_27 [2] : vector<4x16x16xf32> to vector<4x16xf32>
    %63 = vector.shape_cast %62 : vector<4x16xf32> to vector<4x16x1xf32>
    %64 = tpu.reciprocal %63 {approx = true} : vector<4x16x1xf32> -> vector<4x16x1xf32>
    %65 = vector.broadcast %64 : vector<4x16x1xf32> to vector<4x16x16xf32>
    %66 = arith.mulf %61, %65 : vector<4x16x16xf32>
    "tpu.trace_start"() <{level = 10 : i32, message = "wij,wjd->wid"}> : () -> ()
    %cst_28 = arith.constant dense<0.000000e+00> : vector<4x16x16xf32>
    %67 = tpu.matmul %66, %54, %cst_28 {dimension_numbers = #tpu.dot_dimension_numbers<[2], [1], [1], [2], [0, 0, 0, 1, 1, 2], [0], [0]>} : vector<4x16x16xf32>, vector<4x16x16xf32>, vector<4x16x16xf32> -> vector<4x16x16xf32>
    "tpu.trace_stop"() : () -> ()
    %68 = vector.shape_cast %67 : vector<4x16x16xf32> to vector<64x16xf32>
    %c1 = arith.constant 1 : index
    %c0_29 = arith.constant 0 : index
    %c0_30 = arith.constant 0 : index
    %69 = vector.load %arg6[%c1, %c0_29, %c0_30] : memref<2x16x32xf32, #tpu.memory_space<vmem>>, vector<1x16x32xf32>
    %70 = vector.shape_cast %69 : vector<1x16x32xf32> to vector<16x32xf32>
    %cst_31 = arith.constant dense<0.000000e+00> : vector<64x32xf32>
    %71 = tpu.matmul %68, %70, %cst_31 {dimension_numbers = #tpu.dot_dimension_numbers<[1], [0], [0], [1], [0, 0, 1, 1], [], []>} : vector<64x16xf32>, vector<16x32xf32>, vector<64x32xf32> -> vector<64x32xf32>
    %72 = arith.addf %51, %71 : vector<64x32xf32>
    %c0_32 = arith.constant 0 : index
    %c0_33 = arith.constant 0 : index
    %73 = vector.load %arg7[%c0_32, %c0_33] : memref<1x32xf32, #tpu.memory_space<vmem>>, vector<1x32xf32>
    %74 = vector.broadcast %73 : vector<1x32xf32> to vector<64x32xf32>
    %75 = arith.addf %72, %74 : vector<64x32xf32>
    %76 = arith.addf %75, %1 : vector<64x32xf32>
    %77 = vector.shape_cast %76 : vector<64x32xf32> to vector<4x16x32xf32>
    %c0_34 = arith.constant 0 : index
    %c0_35 = arith.constant 0 : index
    %c0_36 = arith.constant 0 : index
    %78 = vector.load %arg8[%c0_34, %c0_35, %c0_36] : memref<4x16x32xf32, #tpu.memory_space<vmem>>, vector<4x16x32xf32>
    tpu.vector_store %arg8[%c0_34, %c0_35, %c0_36], %77 {strides = array<i32>} : memref<4x16x32xf32, #tpu.memory_space<vmem>>, vector<4x16x32xf32>,
    return
  }
  func.func @transform_0(%arg0: i32) -> (i32, i32, i32) {
    %c0_i32 = arith.constant 0 : i32
    %c0_i32_0 = arith.constant 0 : i32
    %c0_i32_1 = arith.constant 0 : i32
    return %arg0, %c0_i32, %c0_i32_0 : i32, i32, i32
  }
  func.func @transform_1(%arg0: i32) -> (i32, i32) {
    %c0_i32 = arith.constant 0 : i32
    %c0_i32_0 = arith.constant 0 : i32
    %c0_i32_1 = arith.constant 0 : i32
    return %c0_i32, %c0_i32_0 : i32, i32
  }
  func.func @transform_2(%arg0: i32) -> (i32, i32) {
    %c0_i32 = arith.constant 0 : i32
    %c0_i32_0 = arith.constant 0 : i32
    %c0_i32_1 = arith.constant 0 : i32
    return %c0_i32, %c0_i32_0 : i32, i32
  }
  func.func @transform_3(%arg0: i32) -> (i32, i32) {
    %c0_i32 = arith.constant 0 : i32
    %c0_i32_0 = arith.constant 0 : i32
    %c0_i32_1 = arith.constant 0 : i32
    return %c0_i32, %c0_i32_0 : i32, i32
  }
  func.func @transform_4(%arg0: i32) -> (i32, i32, i32) {
    %c0_i32 = arith.constant 0 : i32
    %c0_i32_0 = arith.constant 0 : i32
    %c0_i32_1 = arith.constant 0 : i32
    %c0_i32_2 = arith.constant 0 : i32
    return %c0_i32, %c0_i32_0, %c0_i32_1 : i32, i32, i32
  }
  func.func @transform_5(%arg0: i32) -> (i32, i32, i32) {
    %c0_i32 = arith.constant 0 : i32
    %c0_i32_0 = arith.constant 0 : i32
    %c0_i32_1 = arith.constant 0 : i32
    %c0_i32_2 = arith.constant 0 : i32
    return %c0_i32, %c0_i32_0, %c0_i32_1 : i32, i32, i32
  }
  func.func @transform_6(%arg0: i32) -> (i32, i32) {
    %c0_i32 = arith.constant 0 : i32
    %c0_i32_0 = arith.constant 0 : i32
    %c0_i32_1 = arith.constant 0 : i32
    return %c0_i32, %c0_i32_0 : i32, i32
  }
  func.func @transform_7(%arg0: i32) -> (i32, i32, i32) {
    %c0_i32 = arith.constant 0 : i32
    %c0_i32_0 = arith.constant 0 : i32
    %c0_i32_1 = arith.constant 0 : i32
    return %arg0, %c0_i32, %c0_i32_0 : i32, i32, i32
  }
}

</mosaic_0001>

<llo_original>
// kernel: tpu_custom_call.1
$region0: #{tpu_custom_call.1}
  #allocation0 [shape = 'u32[]', space=smem, size = 0x4, offset = 0x4, fixed_abs, tag = 'smem constant byte address 0x4 - core index']
  #allocation1 [shape = 'u32[144,128]{1,0:T(1,128)}', space=vmem, size = 0x12000, scoped, tag = 'internal scratch']
  %s0 = inlined_call_operand.hbm [shape: f32[8,128], index: 0, kind: input, shape index: {}]
  %s1 = inlined_call_operand.hbm [shape: f32[16,128], index: 1, kind: output, shape index: {}]
  %s2 = sld [smem:[#allocation0]]
  $region41: #{tpu_custom_call.1} parent=0
    _
  %s4 = ssub.s32 1, %s2
  %s5 = scalar_select 0, %s4, %s2
  $region1: #{tpu_custom_call.1} parent=0
    #allocation2 [shape = 'u8[4096]{0}', space=vmem, size = 0x1000, scoped, tag = 'input window, operand 0, single buffered']
    #allocation3 [shape = 's32[2]{0}', space=sflag, size = 0x8, scoped, tag = 'scoped memory for tpu_custom_call.1']
    #allocation4 [shape = 's32[2]{0}', space=sflag, size = 0x8, scoped, tag = 'scoped memory for tpu_custom_call.1']
    #allocation5 [shape = 'u8[8192]{0}', space=vmem, size = 0x2000, scoped, tag = 'output window, operand 0']
    %6 = vsyncpa [#allocation3], 0
    %7 = vsyncpa [#allocation4], 0
    %s8 = scalar_lea.sflag [#allocation4], 1
    %9 = vsyncpa %s8, 0
    loop: start=0, step=1, limit=4
    $region2: #{tpu_custom_call.1} parent=1 // loop_pre_header
      _
    $region3: #{tpu_custom_call.1} parent=1 // loop_header
      %s11 = sphi 0, %s15
      %p12 = scmp.ge.s32.totalorder %s11, 4
      %s19 = sphi 0, %s19
      %s21 = sphi 0, %s19
      %s22 = sphi 0, %s21
      %s36 = sphi 0, %s22
      %s42 = sphi 0, %s44
      %s45 = sphi 0, %s42
      %s46 = sphi 0, %s45
      %s62 = sphi 0, %s46
    $region4: #{tpu_custom_call.1} parent=1 // loop_header_branch
      %14 = sbr.rel (%p12) target = $region8
    $region5: #{tpu_custom_call.1} parent=1 // loop_body
      %s16 = ssub.s32 %s11, 1
      %s17 = ssub.s32 %s11, 2
      %s18 = sadd.s32 %s11, 1
      %s20 = sadd.s32 %s19, 1
      %p23 = scmp.eq.s32.totalorder %s11, 1
      %p24 = scmp.ne.s32.totalorder %s19, %s21
      %p25 = scmp.eq.s32.totalorder %s11, 0
      %p26 = por %p24, %p25
      %p27 = scmp.ne.s32.totalorder %s19, %s21
      %p28 = scmp.eq.s32.totalorder %s16, 1
      %p29 = por %p27, %p28
      %p30 = scmp.ne.s32.totalorder %s21, %s22
      %p31 = scmp.eq.s32.totalorder %s16, 0
      %p32 = por %p30, %p31
      %p33 = scmp.ne.s32.totalorder %s21, %s22
      %p34 = scmp.eq.s32.totalorder %s17, 1
      %p35 = por %p33, %p34
      %p37 = scmp.ne.s32.totalorder %s22, %s36
      %p38 = scmp.eq.s32.totalorder %s17, 0
      %p39 = por %p37, %p38
      %s40 = ssub.s32 %s11, %s18
      %p41 = scmp.eq.s32.totalorder %s40, 0
      %s43 = sadd.s32 %s42, 1
      %s44 = scalar_select %p41, %s42, %s43
      %p47 = pneg %p41
      %p48 = scmp.eq.s32.totalorder %s11, 1
      %p49 = por %p47, %p48
      %p50 = scmp.ne.s32.totalorder %s42, %s45
      %p51 = scmp.eq.s32.totalorder %s11, 0
      %p52 = por %p50, %p51
      %p53 = scmp.ne.s32.totalorder %s42, %s45
      %p54 = scmp.eq.s32.totalorder %s16, 1
      %p55 = por %p53, %p54
      %p56 = scmp.ne.s32.totalorder %s45, %s46
      %p57 = scmp.eq.s32.totalorder %s16, 0
      %p58 = por %p56, %p57
      %p59 = scmp.ne.s32.totalorder %s45, %s46
      %p60 = scmp.eq.s32.totalorder %s17, 1
      %p61 = por %p59, %p60
      %p63 = scmp.ne.s32.totalorder %s46, %s62
      %p64 = scmp.eq.s32.totalorder %s17, 0
      %p65 = por %p63, %p64
      %p66 = scmp.le.s32.totalorder 1, %s11
      %p67 = scmp.lt.s32.totalorder %s11, 3
      %p68 = pnand %p66, %p67
      %p69 = pneg %p68
      // Predicated region
      $region9: #{tpu_custom_call.1} parent=5 // pred_check
        _
      $region10: #{tpu_custom_call.1} parent=5 // pred_check_branch
        %71 = sbr.rel (%p68) target = $region12
      $region11: #{tpu_custom_call.1} parent=5 // pred_region
        %s72 = ssub.s32 %s11, 1
        // Predicated region
        $region13: #{tpu_custom_call.1} parent=11 // pred_check
          %p73 = pneg %p32
        $region14: #{tpu_custom_call.1} parent=11 // pred_check_branch
          %75 = sbr.rel (%p73) target = $region16
        $region15: #{tpu_custom_call.1} parent=11 // pred_region
          %s77 = ssub.s32 128, 128
          %78 = vsyncadd [#allocation3], %s77
          %s80 = sshll.u32 [#allocation2], 4
          %s81 = int_to_ptr.vmem [resolvable:$true] %s80
          %83 = dma.hbm_to_vmem [thread:$0]  %s0, 128, %s81, [#allocation3]
        $region16: #{tpu_custom_call.1} parent=11 // pred_fallthru
          _
      $region12: #{tpu_custom_call.1} parent=5 // pred_fallthru
        _
      %p84 = scmp.lt.s32.totalorder %s11, 2
      // Predicated region
      $region17: #{tpu_custom_call.1} parent=5 // pred_check
        %p85 = pneg %p84
      $region18: #{tpu_custom_call.1} parent=5 // pred_check_branch
        %87 = sbr.rel (%p85) target = $region20
      $region19: #{tpu_custom_call.1} parent=5 // pred_region
        _
      $region20: #{tpu_custom_call.1} parent=5 // pred_fallthru
        _
      %p88 = scmp.le.s32.totalorder 1, %s11
      %p89 = scmp.lt.s32.totalorder %s11, 3
      %p90 = pnand %p88, %p89
      %p91 = pneg %p90
      // Predicated region
      $region21: #{tpu_custom_call.1} parent=5 // pred_check
        _
      $region22: #{tpu_custom_call.1} parent=5 // pred_check_branch
        %93 = sbr.rel (%p90) target = $region24
      $region23: #{tpu_custom_call.1} parent=5 // pred_region
        %s94 = ssub.s32 %s11, 1
        // Predicated region
        $region25: #{tpu_custom_call.1} parent=23 // pred_check
          %p95 = pneg %p32
        $region26: #{tpu_custom_call.1} parent=23 // pred_check_branch
          %97 = sbr.rel (%p95) target = $region28
        $region27: #{tpu_custom_call.1} parent=23 // pred_region
          %98 = dma.done [#allocation3], 128
        $region28: #{tpu_custom_call.1} parent=23 // pred_fallthru
          _
        %p99 = pneg %p32
        %p100 = pneg %p29
        %p101 = pneg %p58
        %p102 = pneg %p55
        %s103 = sand.u32 %s45, 1
        %s104 = scalar_lea.sflag [#allocation4], %s103
        %s105 = sand.u32 %s45, 1
        %s106 = smul.addr %s105, 8
        %s107 = scalar_lea.vmem [#allocation5], %s106
        %v108 = vld [vmem:[#allocation2] sm:$0xff]
        %v109 = vmul.f32 %v108, 2.0
        %110 = vst [vmem:[%s107] sm:$0xff] %v109
        %s111 = sand.u32 %s45, 1
        %s112 = scalar_lea.sflag [#allocation4], %s111
        %s113 = sand.u32 %s45, 1
        %s114 = smul.addr %s113, 8
        %s115 = scalar_lea.vmem [#allocation5], %s114
        // Predicated region
        $region29: #{tpu_custom_call.1} parent=23 // pred_check
          %p116 = pneg %p55
        $region30: #{tpu_custom_call.1} parent=23 // pred_check_branch
          %118 = sbr.rel (%p116) target = $region32
        $region31: #{tpu_custom_call.1} parent=23 // pred_region
          %s120 = ssub.s32 128, 128
          %121 = vsyncadd %s112, %s120
          %s122 = smul.addr %s16, 128
          %s123 = scalar_lea.hbm %s1, %s122
          %s125 = sshll.u32 %s115, 4
          %s126 = int_to_ptr.vmem [resolvable:$true] %s125
          %128 = dma.vmem_to_hbm [thread:$0]  %s126, 128, %s123, %s112
        $region32: #{tpu_custom_call.1} parent=23 // pred_fallthru
          _
      $region24: #{tpu_custom_call.1} parent=5 // pred_fallthru
        _
      %p129 = scmp.le.s32.totalorder 2, %s11
      // Predicated region
      $region33: #{tpu_custom_call.1} parent=5 // pred_check
        %p130 = pneg %p129
      $region34: #{tpu_custom_call.1} parent=5 // pred_check_branch
        %132 = sbr.rel (%p130) target = $region36
      $region35: #{tpu_custom_call.1} parent=5 // pred_region
        %s133 = ssub.s32 %s11, 2
        // Predicated region
        $region37: #{tpu_custom_call.1} parent=35 // pred_check
          %p134 = pneg %p61
        $region38: #{tpu_custom_call.1} parent=35 // pred_check_branch
          %136 = sbr.rel (%p134) target = $region40
        $region39: #{tpu_custom_call.1} parent=35 // pred_region
          %s137 = sand.u32 %s46, 1
          %s138 = scalar_lea.sflag [#allocation4], %s137
          %s139 = sand.u32 %s46, 1
          %s140 = smul.addr %s139, 8
          %s141 = scalar_lea.vmem [#allocation5], %s140
          %142 = dma.done %s138, 128
        $region40: #{tpu_custom_call.1} parent=35 // pred_fallthru
          _
      $region36: #{tpu_custom_call.1} parent=5 // pred_fallthru
        _
    $region6: #{tpu_custom_call.1} parent=1 // loop_footer
      %s15 = sadd.s32 1, %s11
    $region7: #{tpu_custom_call.1} parent=1 // loop_footer_branch
      %10 = sbr.rel target = $region3
    $region8: #{tpu_custom_call.1} parent=1 // loop_exit
      _
    %143 = vsyncpa [#allocation3], 1
    %s144 = scalar_lea.sflag [#allocation3], 1
    %145 = vsyncpa %s144, 1
    %146 = vsyncpa [#allocation4], 1
    %s147 = scalar_lea.sflag [#allocation4], 1
    %148 = vsyncpa %s147, 1

// kernel: tpu_custom_call.1
$region0: #{tpu_custom_call.1}
  #allocation0 [shape = 'u32[]', space=smem, size = 0x4, offset = 0x4, fixed_abs, tag = 'smem constant byte address 0x4 - core index']
  #allocation1 [shape = 'u32[144,128]{1,0:T(1,128)}', space=vmem, size = 0x12000, scoped, tag = 'internal scratch']
  %s0 = inlined_call_operand.hbm [shape: f32[8,16,32], index: 0, kind: input, shape index: {}]
  %s1 = inlined_call_operand.vmem [shape: f32[1,32], index: 1, kind: input, shape index: {}]
  %s2 = inlined_call_operand.vmem [shape: f32[1,32], index: 2, kind: input, shape index: {}]
  %s3 = inlined_call_operand.hbm [shape: f32[32,96], index: 3, kind: input, shape index: {}]
  %s4 = inlined_call_operand.hbm [shape: f32[4,16,16], index: 4, kind: input, shape index: {}]
  %s5 = inlined_call_operand.hbm [shape: f32[2,16,32], index: 5, kind: input, shape index: {}]
  %s6 = inlined_call_operand.vmem [shape: f32[1,32], index: 6, kind: input, shape index: {}]
  %s7 = inlined_call_operand.hbm [shape: f32[8,16,32], index: 7, kind: output, shape index: {}]
  %s8 = sld [smem:[#allocation0]]
  $region77: #{tpu_custom_call.1} parent=0
    _
  %s10 = ssub.s32 1, %s8
  %s11 = scalar_select 0, %s10, %s8
  $region1: #{tpu_custom_call.1} parent=0
    #allocation2 [shape = 'u8[65536]{0}', space=vmem, size = 0x10000, scoped, tag = 'input window, operand 0']
    #allocation3 [shape = 's32[2]{0}', space=sflag, size = 0x8, scoped, tag = 'scoped memory for tpu_custom_call.1']
    #allocation4 [shape = 's32[2]{0}', space=sflag, size = 0x8, scoped, tag = 'scoped memory for tpu_custom_call.1']
    #allocation5 [shape = 'u8[16384]{0}', space=vmem, size = 0x4000, scoped, tag = 'input window, operand 3, single buffered']
    #allocation6 [shape = 's32[1]{0}', space=sflag, size = 0x4, scoped, tag = 'scoped memory for tpu_custom_call.1']
    #allocation7 [shape = 'u8[32768]{0}', space=vmem, size = 0x8000, scoped, tag = 'input window, operand 4, single buffered']
    #allocation8 [shape = 'u8[16384]{0}', space=vmem, size = 0x4000, scoped, tag = 'input window, operand 5, single buffered']
    #allocation9 [shape = 's32[1]{0}', space=sflag, size = 0x4, scoped, tag = 'scoped memory for tpu_custom_call.1']
    #allocation10 [shape = 'u8[65536]{0}', space=vmem, size = 0x10000, scoped, tag = 'output window, operand 0']
    %12 = vsyncpa [#allocation3], 0
    %s13 = scalar_lea.sflag [#allocation3], 1
    %14 = vsyncpa %s13, 0
    %15 = vsyncpa [#allocation6], 0
    %16 = vsyncpa [#allocation9], 0
    %17 = vsyncpa [#allocation4], 0
    %s18 = scalar_lea.sflag [#allocation4], 1
    %19 = vsyncpa %s18, 0
    loop: start=0, step=1, limit=4
    $region2: #{tpu_custom_call.1} parent=1 // loop_pre_header
      _
    $region3: #{tpu_custom_call.1} parent=1 // loop_header
      %s21 = sphi 0, %s25
      %p22 = scmp.ge.s32.totalorder %s21, 4
      %s31 = sphi 0, %s33
      %s34 = sphi 0, %s31
      %s35 = sphi 0, %s34
      %s51 = sphi 0, %s35
      %s55 = sphi 0, %s55
      %s57 = sphi 0, %s55
      %s58 = sphi 0, %s57
      %s72 = sphi 0, %s58
      %s76 = sphi 0, %s76
      %s78 = sphi 0, %s76
      %s79 = sphi 0, %s78
      %s93 = sphi 0, %s79
      %s97 = sphi 0, %s97
      %s99 = sphi 0, %s97
      %s100 = sphi 0, %s99
      %s114 = sphi 0, %s100
      %s118 = sphi 0, %s118
      %s120 = sphi 0, %s118
      %s121 = sphi 0, %s120
      %s135 = sphi 0, %s121
      %s139 = sphi 0, %s139
      %s141 = sphi 0, %s139
      %s142 = sphi 0, %s141
      %s156 = sphi 0, %s142
      %s160 = sphi 0, %s160
      %s162 = sphi 0, %s160
      %s163 = sphi 0, %s162
      %s177 = sphi 0, %s163
      %s183 = sphi 0, %s185
      %s186 = sphi 0, %s183
      %s187 = sphi 0, %s186
      %s203 = sphi 0, %s187
    $region4: #{tpu_custom_call.1} parent=1 // loop_header_branch
      %24 = sbr.rel (%p22) target = $region8
    $region5: #{tpu_custom_call.1} parent=1 // loop_body
      %s26 = ssub.s32 %s21, 1
      %s27 = ssub.s32 %s21, 2
      %s28 = sadd.s32 %s21, 1
      %s29 = ssub.s32 %s21, %s28
      %p30 = scmp.eq.s32.totalorder %s29, 0
      %s32 = sadd.s32 %s31, 1
      %s33 = scalar_select %p30, %s31, %s32
      %p36 = pneg %p30
      %p37 = scmp.eq.s32.totalorder %s21, 1
      %p38 = por %p36, %p37
      %p39 = scmp.ne.s32.totalorder %s31, %s34
      %p40 = scmp.eq.s32.totalorder %s21, 0
      %p41 = por %p39, %p40
      %p42 = scmp.ne.s32.totalorder %s31, %s34
      %p43 = scmp.eq.s32.totalorder %s26, 1
      %p44 = por %p42, %p43
      %p45 = scmp.ne.s32.totalorder %s34, %s35
      %p46 = scmp.eq.s32.totalorder %s26, 0
      %p47 = por %p45, %p46
      %p48 = scmp.ne.s32.totalorder %s34, %s35
      %p49 = scmp.eq.s32.totalorder %s27, 1
      %p50 = por %p48, %p49
      %p52 = scmp.ne.s32.totalorder %s35, %s51
      %p53 = scmp.eq.s32.totalorder %s27, 0
      %p54 = por %p52, %p53
      %s56 = sadd.s32 %s55, 1
      %p59 = scmp.eq.s32.totalorder %s21, 1
      %p60 = scmp.ne.s32.totalorder %s55, %s57
      %p61 = scmp.eq.s32.totalorder %s21, 0
      %p62 = por %p60, %p61
      %p63 = scmp.ne.s32.totalorder %s55, %s57
      %p64 = scmp.eq.s32.totalorder %s26, 1
      %p65 = por %p63, %p64
      %p66 = scmp.ne.s32.totalorder %s57, %s58
      %p67 = scmp.eq.s32.totalorder %s26, 0
      %p68 = por %p66, %p67
      %p69 = scmp.ne.s32.totalorder %s57, %s58
      %p70 = scmp.eq.s32.totalorder %s27, 1
      %p71 = por %p69, %p70
      %p73 = scmp.ne.s32.totalorder %s58, %s72
      %p74 = scmp.eq.s32.totalorder %s27, 0
      %p75 = por %p73, %p74
      %s77 = sadd.s32 %s76, 1
      %p80 = scmp.eq.s32.totalorder %s21, 1
      %p81 = scmp.ne.s32.totalorder %s76, %s78
      %p82 = scmp.eq.s32.totalorder %s21, 0
      %p83 = por %p81, %p82
      %p84 = scmp.ne.s32.totalorder %s76, %s78
      %p85 = scmp.eq.s32.totalorder %s26, 1
      %p86 = por %p84, %p85
      %p87 = scmp.ne.s32.totalorder %s78, %s79
      %p88 = scmp.eq.s32.totalorder %s26, 0
      %p89 = por %p87, %p88
      %p90 = scmp.ne.s32.totalorder %s78, %s79
      %p91 = scmp.eq.s32.totalorder %s27, 1
      %p92 = por %p90, %p91
      %p94 = scmp.ne.s32.totalorder %s79, %s93
      %p95 = scmp.eq.s32.totalorder %s27, 0
      %p96 = por %p94, %p95
      %s98 = sadd.s32 %s97, 1
      %p101 = scmp.eq.s32.totalorder %s21, 1
      %p102 = scmp.ne.s32.totalorder %s97, %s99
      %p103 = scmp.eq.s32.totalorder %s21, 0
      %p104 = por %p102, %p103
      %p105 = scmp.ne.s32.totalorder %s97, %s99
      %p106 = scmp.eq.s32.totalorder %s26, 1
      %p107 = por %p105, %p106
      %p108 = scmp.ne.s32.totalorder %s99, %s100
      %p109 = scmp.eq.s32.totalorder %s26, 0
      %p110 = por %p108, %p109
      %p111 = scmp.ne.s32.totalorder %s99, %s100
      %p112 = scmp.eq.s32.totalorder %s27, 1
      %p113 = por %p111, %p112
      %p115 = scmp.ne.s32.totalorder %s100, %s114
      %p116 = scmp.eq.s32.totalorder %s27, 0
      %p117 = por %p115, %p116
      %s119 = sadd.s32 %s118, 1
      %p122 = scmp.eq.s32.totalorder %s21, 1
      %p123 = scmp.ne.s32.totalorder %s118, %s120
      %p124 = scmp.eq.s32.totalorder %s21, 0
      %p125 = por %p123, %p124
      %p126 = scmp.ne.s32.totalorder %s118, %s120
      %p127 = scmp.eq.s32.totalorder %s26, 1
      %p128 = por %p126, %p127
      %p129 = scmp.ne.s32.totalorder %s120, %s121
      %p130 = scmp.eq.s32.totalorder %s26, 0
      %p131 = por %p129, %p130
      %p132 = scmp.ne.s32.totalorder %s120, %s121
      %p133 = scmp.eq.s32.totalorder %s27, 1
      %p134 = por %p132, %p133
      %p136 = scmp.ne.s32.totalorder %s121, %s135
      %p137 = scmp.eq.s32.totalorder %s27, 0
      %p138 = por %p136, %p137
      %s140 = sadd.s32 %s139, 1
      %p143 = scmp.eq.s32.totalorder %s21, 1
      %p144 = scmp.ne.s32.totalorder %s139, %s141
      %p145 = scmp.eq.s32.totalorder %s21, 0
      %p146 = por %p144, %p145
      %p147 = scmp.ne.s32.totalorder %s139, %s141
      %p148 = scmp.eq.s32.totalorder %s26, 1
      %p149 = por %p147, %p148
      %p150 = scmp.ne.s32.totalorder %s141, %s142
      %p151 = scmp.eq.s32.totalorder %s26, 0
      %p152 = por %p150, %p151
      %p153 = scmp.ne.s32.totalorder %s141, %s142
      %p154 = scmp.eq.s32.totalorder %s27, 1
      %p155 = por %p153, %p154
      %p157 = scmp.ne.s32.totalorder %s142, %s156
      %p158 = scmp.eq.s32.totalorder %s27, 0
      %p159 = por %p157, %p158
      %s161 = sadd.s32 %s160, 1
      %p164 = scmp.eq.s32.totalorder %s21, 1
      %p165 = scmp.ne.s32.totalorder %s160, %s162
      %p166 = scmp.eq.s32.totalorder %s21, 0
      %p167 = por %p165, %p166
      %p168 = scmp.ne.s32.totalorder %s160, %s162
      %p169 = scmp.eq.s32.totalorder %s26, 1
      %p170 = por %p168, %p169
      %p171 = scmp.ne.s32.totalorder %s162, %s163
      %p172 = scmp.eq.s32.totalorder %s26, 0
      %p173 = por %p171, %p172
      %p174 = scmp.ne.s32.totalorder %s162, %s163
      %p175 = scmp.eq.s32.totalorder %s27, 1
      %p176 = por %p174, %p175
      %p178 = scmp.ne.s32.totalorder %s163, %s177
      %p179 = scmp.eq.s32.totalorder %s27, 0
      %p180 = por %p178, %p179
      %s181 = ssub.s32 %s21, %s28
      %p182 = scmp.eq.s32.totalorder %s181, 0
      %s184 = sadd.s32 %s183, 1
      %s185 = scalar_select %p182, %s183, %s184
      %p188 = pneg %p182
      %p189 = scmp.eq.s32.totalorder %s21, 1
      %p190 = por %p188, %p189
      %p191 = scmp.ne.s32.totalorder %s183, %s186
      %p192 = scmp.eq.s32.totalorder %s21, 0
      %p193 = por %p191, %p192
      %p194 = scmp.ne.s32.totalorder %s183, %s186
      %p195 = scmp.eq.s32.totalorder %s26, 1
      %p196 = por %p194, %p195
      %p197 = scmp.ne.s32.totalorder %s186, %s187
      %p198 = scmp.eq.s32.totalorder %s26, 0
      %p199 = por %p197, %p198
      %p200 = scmp.ne.s32.totalorder %s186, %s187
      %p201 = scmp.eq.s32.totalorder %s27, 1
      %p202 = por %p200, %p201
      %p204 = scmp.ne.s32.totalorder %s187, %s203
      %p205 = scmp.eq.s32.totalorder %s27, 0
      %p206 = por %p204, %p205
      %p207 = scmp.le.s32.totalorder 1, %s21
      %p208 = scmp.lt.s32.totalorder %s21, 3
      %p209 = pnand %p207, %p208
      %p210 = pneg %p209
      // Predicated region
      $region9: #{tpu_custom_call.1} parent=5 // pred_check
        _
      $region10: #{tpu_custom_call.1} parent=5 // pred_check_branch
        %212 = sbr.rel (%p209) target = $region12
      $region11: #{tpu_custom_call.1} parent=5 // pred_region
        %s213 = ssub.s32 %s21, 1
        // Predicated region
        $region13: #{tpu_custom_call.1} parent=11 // pred_check
          %p214 = pneg %p68
        $region14: #{tpu_custom_call.1} parent=11 // pred_check_branch
          %216 = sbr.rel (%p214) target = $region16
        $region15: #{tpu_custom_call.1} parent=11 // pred_region
          _
        $region16: #{tpu_custom_call.1} parent=11 // pred_fallthru
          _
        // Predicated region
        $region17: #{tpu_custom_call.1} parent=11 // pred_check
          %p217 = pneg %p89
        $region18: #{tpu_custom_call.1} parent=11 // pred_check_branch
          %219 = sbr.rel (%p217) target = $region20
        $region19: #{tpu_custom_call.1} parent=11 // pred_region
          _
        $region20: #{tpu_custom_call.1} parent=11 // pred_fallthru
          _
        // Predicated region
        $region21: #{tpu_custom_call.1} parent=11 // pred_check
          %p220 = pneg %p110
        $region22: #{tpu_custom_call.1} parent=11 // pred_check_branch
          %222 = sbr.rel (%p220) target = $region24
        $region23: #{tpu_custom_call.1} parent=11 // pred_region
          %s224 = ssub.s32 512, 512
          %225 = vsyncadd [#allocation6], %s224
          %s226 = sshll.u32 [#allocation5], 4
          %s227 = int_to_ptr.vmem [resolvable:$true] %s226
          %232 = dma.hbm_to_vmem [thread:$0]  %s3, 512, %s227, [#allocation6], 128, 128, 8
        $region24: #{tpu_custom_call.1} parent=11 // pred_fallthru
          _
        // Predicated region
        $region25: #{tpu_custom_call.1} parent=11 // pred_check
          %p233 = pneg %p131
        $region26: #{tpu_custom_call.1} parent=11 // pred_check_branch
          %235 = sbr.rel (%p233) target = $region28
        $region27: #{tpu_custom_call.1} parent=11 // pred_region
          %s237 = ssub.s32 1024, 1024
          %238 = vsyncadd [#allocation6], %s237
          %s239 = sshll.u32 [#allocation7], 4
          %s240 = int_to_ptr.vmem [resolvable:$true] %s239
          %245 = dma.hbm_to_vmem [thread:$0]  %s4, 1024, %s240, [#allocation6], 128, 128, 8
        $region28: #{tpu_custom_call.1} parent=11 // pred_fallthru
          _
        // Predicated region
        $region29: #{tpu_custom_call.1} parent=11 // pred_check
          %p246 = pneg %p152
        $region30: #{tpu_custom_call.1} parent=11 // pred_check_branch
          %248 = sbr.rel (%p246) target = $region32
        $region31: #{tpu_custom_call.1} parent=11 // pred_region
          %s250 = ssub.s32 512, 512
          %251 = vsyncadd [#allocation9], %s250
          %s252 = sshll.u32 [#allocation8], 4
          %s253 = int_to_ptr.vmem [resolvable:$true] %s252
          %258 = dma.hbm_to_vmem [thread:$0]  %s5, 512, %s253, [#allocation9], 128, 128, 8
        $region32: #{tpu_custom_call.1} parent=11 // pred_fallthru
          _
        // Predicated region
        $region33: #{tpu_custom_call.1} parent=11 // pred_check
          %p259 = pneg %p173
        $region34: #{tpu_custom_call.1} parent=11 // pred_check_branch
          %261 = sbr.rel (%p259) target = $region36
        $region35: #{tpu_custom_call.1} parent=11 // pred_region
          _
        $region36: #{tpu_custom_call.1} parent=11 // pred_fallthru
          _
      $region12: #{tpu_custom_call.1} parent=5 // pred_fallthru
        _
      %p262 = scmp.lt.s32.totalorder %s21, 2
      // Predicated region
      $region37: #{tpu_custom_call.1} parent=5 // pred_check
        %p263 = pneg %p262
      $region38: #{tpu_custom_call.1} parent=5 // pred_check_branch
        %265 = sbr.rel (%p263) target = $region40
      $region39: #{tpu_custom_call.1} parent=5 // pred_region
        // Predicated region
        $region41: #{tpu_custom_call.1} parent=39 // pred_check
          %p266 = pneg %p41
        $region42: #{tpu_custom_call.1} parent=39 // pred_check_branch
          %268 = sbr.rel (%p266) target = $region44
        $region43: #{tpu_custom_call.1} parent=39 // pred_region
          %s269 = sand.u32 %s31, 1
          %s270 = scalar_lea.sflag [#allocation3], %s269
          %s271 = sand.u32 %s31, 1
          %s272 = smul.addr %s271, 64
          %s273 = scalar_lea.vmem [#allocation2], %s272
          %s274 = smul.u32 4, %s21
          %s276 = ssub.s32 1024, 1024
          %277 = vsyncadd %s270, %s276
          %s278 = smul.addr %s274, 2
          %s279 = smul.addr %s278, 128
          %s280 = scalar_lea.hbm %s0, %s279
          %s281 = sshll.u32 %s273, 4
          %s282 = int_to_ptr.vmem [resolvable:$true] %s281
          %287 = dma.hbm_to_vmem [thread:$0]  %s280, 1024, %s282, %s270, 128, 128, 8
        $region44: #{tpu_custom_call.1} parent=39 // pred_fallthru
          _
      $region40: #{tpu_custom_call.1} parent=5 // pred_fallthru
        _
      %p288 = scmp.le.s32.totalorder 1, %s21
      %p289 = scmp.lt.s32.totalorder %s21, 3
      %p290 = pnand %p288, %p289
      %p291 = pneg %p290
      // Predicated region
      $region45: #{tpu_custom_call.1} parent=5 // pred_check
        _
      $region46: #{tpu_custom_call.1} parent=5 // pred_check_branch
        %293 = sbr.rel (%p290) target = $region48
      $region47: #{tpu_custom_call.1} parent=5 // pred_region
        %s294 = ssub.s32 %s21, 1
        %s295 = sand.u32 %s34, 1
        %s296 = scalar_lea.sflag [#allocation3], %s295
        %s297 = sand.u32 %s34, 1
        %s298 = smul.addr %s297, 64
        %s299 = scalar_lea.vmem [#allocation2], %s298
        // Predicated region
        $region49: #{tpu_custom_call.1} parent=47 // pred_check
          %p300 = pneg %p47
        $region50: #{tpu_custom_call.1} parent=47 // pred_check_branch
          %302 = sbr.rel (%p300) target = $region52
        $region51: #{tpu_custom_call.1} parent=47 // pred_region
          %303 = dma.done %s296, 1024
        $region52: #{tpu_custom_call.1} parent=47 // pred_fallthru
          _
        // Predicated region
        $region53: #{tpu_custom_call.1} parent=47 // pred_check
          %p304 = pneg %p110
        $region54: #{tpu_custom_call.1} parent=47 // pred_check_branch
          %306 = sbr.rel (%p304) target = $region56
        $region55: #{tpu_custom_call.1} parent=47 // pred_region
          %307 = dma.done [#allocation6], 512
        $region56: #{tpu_custom_call.1} parent=47 // pred_fallthru
          _
        // Predicated region
        $region57: #{tpu_custom_call.1} parent=47 // pred_check
          %p308 = pneg %p131
        $region58: #{tpu_custom_call.1} parent=47 // pred_check_branch
          %310 = sbr.rel (%p308) target = $region60
        $region59: #{tpu_custom_call.1} parent=47 // pred_region
          %311 = dma.done [#allocation6], 1024
        $region60: #{tpu_custom_call.1} parent=47 // pred_fallthru
          _
        // Predicated region
        $region61: #{tpu_custom_call.1} parent=47 // pred_check
          %p312 = pneg %p152
        $region62: #{tpu_custom_call.1} parent=47 // pred_check_branch
          %314 = sbr.rel (%p312) target = $region64
        $region63: #{tpu_custom_call.1} parent=47 // pred_region
          %315 = dma.done [#allocation9], 512
        $region64: #{tpu_custom_call.1} parent=47 // pred_fallthru
          _
        %s316 = sand.u32 %s34, 1
        %s317 = scalar_lea.sflag [#allocation3], %s316
        %s318 = sand.u32 %s34, 1
        %s319 = smul.addr %s318, 64
        %s320 = scalar_lea.vmem [#allocation2], %s319
        %p321 = pneg %p47
        %p322 = pneg %p44
        %p323 = pneg %p68
        %p324 = pneg %p65
        %p325 = pneg %p89
        %p326 = pneg %p86
        %p327 = pneg %p110
        %p328 = pneg %p107
        %p329 = pneg %p131
        %p330 = pneg %p128
        %p331 = pneg %p152
        %p332 = pneg %p149
        %p333 = pneg %p173
        %p334 = pneg %p170
        %p335 = pneg %p199
        %p336 = pneg %p196
        %s337 = sand.u32 %s186, 1
        %s338 = scalar_lea.sflag [#allocation4], %s337
        %s339 = sand.u32 %s186, 1
        %s340 = smul.addr %s339, 64
        %s341 = scalar_lea.vmem [#allocation10], %s340
        %s342 = smul.u32 4, %s26
        %s343 = smul.u32 4, %s26
        %v344 = vld [vmem:[%s299] sm:$0xff]
        %v345 = vld [vmem:[%s299 + $0x8] sm:$0xff]
        %v346 = vld [vmem:[%s299 + $0x10] sm:$0xff]
        %v347 = vld [vmem:[%s299 + $0x18] sm:$0xff]
        %v348 = vld [vmem:[%s299 + $0x20] sm:$0xff]
        %v349 = vld [vmem:[%s299 + $0x28] sm:$0xff]
        %v350 = vld [vmem:[%s299 + $0x30] sm:$0xff]
        %v351 = vld [vmem:[%s299 + $0x38] sm:$0xff]
        %v352 = vld [vmem:[%s1] sm:$0x1]
        %v353 = vld [vmem:[%s2] sm:$0x1]
        %vm354 = vcmask 261120
        %v355 = vsel %vm354, %v344, 0.0
        %356 = vadd.xlane.f32.xlu0 %v355
        %v357 = vpop.xlane.xlu0 %356
        %v358 = vsel %vm354, %v345, 0.0
        %359 = vadd.xlane.f32.xlu0 %v358
        %v360 = vpop.xlane.xlu0 %359
        %v361 = vsel %vm354, %v346, 0.0
        %362 = vadd.xlane.f32.xlu0 %v361
        %v363 = vpop.xlane.xlu0 %362
        %v364 = vsel %vm354, %v347, 0.0
        %365 = vadd.xlane.f32.xlu0 %v364
        %v366 = vpop.xlane.xlu0 %365
        %v367 = vsel %vm354, %v348, 0.0
        %368 = vadd.xlane.f32.xlu0 %v367
        %v369 = vpop.xlane.xlu0 %368
        %v370 = vsel %vm354, %v349, 0.0
        %371 = vadd.xlane.f32.xlu0 %v370
        %v372 = vpop.xlane.xlu0 %371
        %v373 = vsel %vm354, %v350, 0.0
        %374 = vadd.xlane.f32.xlu0 %v373
        %v375 = vpop.xlane.xlu0 %374
        %v376 = vsel %vm354, %v351, 0.0
        %377 = vadd.xlane.f32.xlu0 %v376
        %v378 = vpop.xlane.xlu0 %377
        %v379 = vrcp.pop 32.0
        %v380 = vmul.f32 %v357, %v379
        %v381 = vmul.f32 %v360, %v379
        %v382 = vmul.f32 %v363, %v379
        %v383 = vmul.f32 %v366, %v379
        %v384 = vmul.f32 %v369, %v379
        %v385 = vmul.f32 %v372, %v379
        %v386 = vmul.f32 %v375, %v379
        %v387 = vmul.f32 %v378, %v379
        %v388 = vsub.f32 %v344, %v380
        %v389 = vsub.f32 %v345, %v381
        %v390 = vsub.f32 %v346, %v382
        %v391 = vsub.f32 %v347, %v383
        %v392 = vsub.f32 %v348, %v384
        %v393 = vsub.f32 %v349, %v385
        %v394 = vsub.f32 %v350, %v386
        %v395 = vsub.f32 %v351, %v387
        %v396 = vmul.f32 %v388, %v388
        %v397 = vmul.f32 %v389, %v389
        %v398 = vmul.f32 %v390, %v390
        %v399 = vmul.f32 %v391, %v391
        %v400 = vmul.f32 %v392, %v392
        %v401 = vmul.f32 %v393, %v393
        %v402 = vmul.f32 %v394, %v394
        %v403 = vmul.f32 %v395, %v395
        %v404 = vsel %vm354, %v396, 0.0
        %405 = vadd.xlane.f32.xlu0 %v404
        %v406 = vpop.xlane.xlu0 %405
        %v407 = vsel %vm354, %v397, 0.0
        %408 = vadd.xlane.f32.xlu0 %v407
        %v409 = vpop.xlane.xlu0 %408
        %v410 = vsel %vm354, %v398, 0.0
        %411 = vadd.xlane.f32.xlu0 %v410
        %v412 = vpop.xlane.xlu0 %411
        %v413 = vsel %vm354, %v399, 0.0
        %414 = vadd.xlane.f32.xlu0 %v413
        %v415 = vpop.xlane.xlu0 %414
        %v416 = vsel %vm354, %v400, 0.0
        %417 = vadd.xlane.f32.xlu0 %v416
        %v418 = vpop.xlane.xlu0 %417
        %v419 = vsel %vm354, %v401, 0.0
        %420 = vadd.xlane.f32.xlu0 %v419
        %v421 = vpop.xlane.xlu0 %420
        %v422 = vsel %vm354, %v402, 0.0
        %423 = vadd.xlane.f32.xlu0 %v422
        %v424 = vpop.xlane.xlu0 %423
        %v425 = vsel %vm354, %v403, 0.0
        %426 = vadd.xlane.f32.xlu0 %v425
        %v427 = vpop.xlane.xlu0 %426
        %v428 = vmul.f32 %v406, %v379
        %v429 = vmul.f32 %v409, %v379
        %v430 = vmul.f32 %v412, %v379
        %v431 = vmul.f32 %v415, %v379
        %v432 = vmul.f32 %v418, %v379
        %v433 = vmul.f32 %v421, %v379
        %v434 = vmul.f32 %v424, %v379
        %v435 = vmul.f32 %v427, %v379
        %v436 = vadd.f32 %v428, 1e-05
        %v437 = vadd.f32 %v429, 1e-05
        %v438 = vadd.f32 %v430, 1e-05
        %v439 = vadd.f32 %v431, 1e-05
        %v440 = vadd.f32 %v432, 1e-05
        %v441 = vadd.f32 %v433, 1e-05
        %v442 = vadd.f32 %v434, 1e-05
        %v443 = vadd.f32 %v435, 1e-05
        %v444 = vrsqrt.pop %v436
        %v445 = vrsqrt.pop %v437
        %v446 = vrsqrt.pop %v438
        %v447 = vrsqrt.pop %v439
        %v448 = vrsqrt.pop %v440
        %v449 = vrsqrt.pop %v441
        %v450 = vrsqrt.pop %v442
        %v451 = vrsqrt.pop %v443
        %v452 = vmul.f32 %v388, %v444
        %v453 = vmul.f32 %v389, %v445
        %v454 = vmul.f32 %v390, %v446
        %v455 = vmul.f32 %v391, %v447
        %v456 = vmul.f32 %v392, %v448
        %v457 = vmul.f32 %v393, %v449
        %v458 = vmul.f32 %v394, %v450
        %v459 = vmul.f32 %v395, %v451
        %v461 = vlaneseq
        %v462 = vshrl.u32 %v461, 7
        %v463 = vsub.s32 0, %v462
        %v464 = vrot.slane %v352, %v463
        %v466 = vmul.f32 %v452, %v464
        %v467 = vmul.f32 %v453, %v464
        %v468 = vmul.f32 %v454, %v464
        %v469 = vmul.f32 %v455, %v464
        %v470 = vmul.f32 %v456, %v464
        %v471 = vmul.f32 %v457, %v464
        %v472 = vmul.f32 %v458, %v464
        %v473 = vmul.f32 %v459, %v464
        %v475 = vlaneseq
        %v476 = vshrl.u32 %v475, 7
        %v477 = vsub.s32 0, %v476
        %v478 = vrot.slane %v353, %v477
        %v480 = vadd.f32 %v466, %v478
        %v481 = vadd.f32 %v467, %v478
        %v482 = vadd.f32 %v468, %v478
        %v483 = vadd.f32 %v469, %v478
        %v484 = vadd.f32 %v470, %v478
        %v485 = vadd.f32 %v471, %v478
        %v486 = vadd.f32 %v472, %v478
        %v487 = vadd.f32 %v473, %v478
        %v488 = vld [vmem:[#allocation5] sm:$0xff]
        %v489 = vld [vmem:[#allocation5 + $0x8] sm:$0xff]
        %v490 = vld [vmem:[#allocation5 + $0x10] sm:$0xff]
        %v491 = vld [vmem:[#allocation5 + $0x18] sm:$0xff]
        %v493 = vsel %vm354, %v480, 0
        %v496 = vsel %vm354, %v481, 0
        %v499 = vsel %vm354, %v482, 0
        %v502 = vsel %vm354, %v483, 0
        %v505 = vsel %vm354, %v484, 0
        %v508 = vsel %vm354, %v485, 0
        %v511 = vsel %vm354, %v486, 0
        %v514 = vsel %vm354, %v487, 0
        %516 = vmatprep.subr.mxu0 0.0
        %517 = vmatpush1.msra.mxu0 0.0
        %518 = vmatprep.subr.mxu0 0.0
        %519 = vmatpush1.msra.mxu0 0.0
        %520 = vmatprep.subr.mxu0 0.0
        %521 = vmatpush1.msra.mxu0 0.0
        %522 = vmatprep.subr.mxu0 0.0
        %523 = vmatpush1.msra.mxu0 0.0
        %524 = vmatprep.subr.mxu0 0.0
        %525 = vmatpush1.msra.mxu0 0.0
        %526 = vmatprep.subr.mxu0 0.0
        %527 = vmatpush1.msra.mxu0 0.0
        %528 = vmatprep.subr.mxu0 0.0
        %529 = vmatpush1.msra.mxu0 0.0
        %530 = vmatprep.subr.mxu0 0.0
        %531 = vmatpush1.msra.mxu0 0.0
        %532 = vmatprep.subr.mxu0 0.0
        %533 = vmatpush1.msra.mxu0 0.0
        %534 = vmatprep.subr.mxu0 0.0
        %535 = vmatpush1.msra.mxu0 0.0
        %536 = vmatprep.subr.mxu0 0.0
        %537 = vmatpush1.msra.mxu0 0.0
        %538 = vmatprep.subr.mxu0 0.0
        %539 = vmatpush1.msra.mxu0 0.0
        %540 = vmatprep.subr.mxu0 0.0
        %541 = vmatpush1.msra.mxu0 %v491
        %542 = vmatprep.subr.mxu0 0.0
        %543 = vmatpush1.msra.mxu0 %v490
        %544 = vmatprep.subr.mxu0 0.0
        %545 = vmatpush1.msra.mxu0 %v489
        %546 = vmatprep.subr.mxu0 0.0
        %547 = vmatpush1.msra.mxu0 %v488
        %548 = vmatprep.subr.mxu0 0.0
        %549 = vmatpush2.msra.mxu0 0.0
        %550 = vmatprep.subr.mxu0 0.0
        %551 = vmatpush2.msra.mxu0 0.0
        %552 = vmatprep.subr.mxu0 0.0
        %553 = vmatpush2.msra.mxu0 0.0
        %554 = vmatprep.subr.mxu0 0.0
        %555 = vmatpush2.msra.mxu0 0.0
        %556 = vmatprep.subr.mxu0 0.0
        %557 = vmatpush2.msra.mxu0 0.0
        %558 = vmatprep.subr.mxu0 0.0
        %559 = vmatpush2.msra.mxu0 0.0
        %560 = vmatprep.subr.mxu0 0.0
        %561 = vmatpush2.msra.mxu0 0.0
        %562 = vmatprep.subr.mxu0 0.0
        %563 = vmatpush2.msra.mxu0 0.0
        %564 = vmatprep.subr.mxu0 0.0
        %565 = vmatpush2.msra.mxu0 0.0
        %566 = vmatprep.subr.mxu0 0.0
        %567 = vmatpush2.msra.mxu0 0.0
        %568 = vmatprep.subr.mxu0 0.0
        %569 = vmatpush2.msra.mxu0 0.0
        %570 = vmatprep.subr.mxu0 0.0
        %571 = vmatpush2.msra.mxu0 0.0
        %572 = vmatprep.subr.mxu0 0.0
        %573 = vmatpush2.msra.mxu0 0.0
        %574 = vmatprep.subr.mxu0 0.0
        %575 = vmatpush2.msra.mxu0 0.0
        %576 = vmatprep.subr.mxu0 0.0
        %577 = vmatpush2.msra.mxu0 0.0
        %578 = vmatprep.subr.mxu0 0.0
        %579 = vmatpush2.msra.mxu0 0.0
        %580 = vmatprep.mubr.f32.mxu0 0.0
        %581 = vmatmul.mubr.f32.gmra.mxu0 %v493
        %v582 = vpop.f32.mrf.mxu0
        %v583 = vadd.f32 0.0, %v582
        %v584 = vpop.f32.mrf.mxu0
        %585 = vmatprep.mubr.f32.mxu0 0.0
        %586 = vmatmul.mubr.f32.gmra.mxu0 %v496
        %v587 = vpop.f32.mrf.mxu0
        %v588 = vadd.f32 0.0, %v587
        %v589 = vpop.f32.mrf.mxu0
        %590 = vmatprep.mubr.f32.mxu0 0.0
        %591 = vmatmul.mubr.f32.gmra.mxu0 %v499
        %v592 = vpop.f32.mrf.mxu0
        %v593 = vadd.f32 0.0, %v592
        %v594 = vpop.f32.mrf.mxu0
        %595 = vmatprep.mubr.f32.mxu0 0.0
        %596 = vmatmul.mubr.f32.gmra.mxu0 %v502
        %v597 = vpop.f32.mrf.mxu0
        %v598 = vadd.f32 0.0, %v597
        %v599 = vpop.f32.mrf.mxu0
        %600 = vmatprep.mubr.f32.mxu0 0.0
        %601 = vmatmul.mubr.f32.gmra.mxu0 %v505
        %v602 = vpop.f32.mrf.mxu0
        %v603 = vadd.f32 0.0, %v602
        %v604 = vpop.f32.mrf.mxu0
        %605 = vmatprep.mubr.f32.mxu0 0.0
        %606 = vmatmul.mubr.f32.gmra.mxu0 %v508
        %v607 = vpop.f32.mrf.mxu0
        %v608 = vadd.f32 0.0, %v607
        %v609 = vpop.f32.mrf.mxu0
        %610 = vmatprep.mubr.f32.mxu0 0.0
        %611 = vmatmul.mubr.f32.gmra.mxu0 %v511
        %v612 = vpop.f32.mrf.mxu0
        %v613 = vadd.f32 0.0, %v612
        %v614 = vpop.f32.mrf.mxu0
        %615 = vmatprep.mubr.f32.mxu0 0.0
        %616 = vmatmul.mubr.f32.gmra.mxu0 %v514
        %v617 = vpop.f32.mrf.mxu0
        %v618 = vadd.f32 0.0, %v617
        %v619 = vpop.f32.mrf.mxu0
        %620 = vdwg.mxu0
        %v621 = vld [vmem:[#allocation7] sm:$0xff]
        %v622 = vld [vmem:[#allocation7 + $0x8] sm:$0xff]
        %v623 = vld [vmem:[#allocation7 + $0x10] sm:$0xff]
        %v624 = vld [vmem:[#allocation7 + $0x18] sm:$0xff]
        %v625 = vld [vmem:[#allocation7 + $0x20] sm:$0xff]
        %v626 = vld [vmem:[#allocation7 + $0x28] sm:$0xff]
        %v627 = vld [vmem:[#allocation7 + $0x30] sm:$0xff]
        %v628 = vld [vmem:[#allocation7 + $0x38] sm:$0xff]
        %631 = vrot.lane.b32.xlu0 %v583, 96
        %v632 = vpop.permute.xlu0 %631
        %633 = vrot.lane.b32.xlu0 %v588, 96
        %v634 = vpop.permute.xlu0 %633
        %vm635 = vcmask 130048
        %v636 = vsel %vm635, %v583, 0
        %v638 = vsel %vm635, %v588, 0
        %v640 = vsel %vm635, %v632, 0
        %v642 = vsel %vm635, %v634, 0
        %644 = vmatprep.subr.mxu0 0.0
        %645 = vmatpush1.xpose.msra.mxu0 0.0
        %646 = vmatprep.subr.mxu0 0.0
        %647 = vmatpush1.xpose.msra.mxu0 0.0
        %648 = vmatprep.subr.mxu0 0.0
        %649 = vmatpush1.xpose.msra.mxu0 0.0
        %650 = vmatprep.subr.mxu0 0.0
        %651 = vmatpush1.xpose.msra.mxu0 0.0
        %652 = vmatprep.subr.mxu0 0.0
        %653 = vmatpush1.xpose.msra.mxu0 0.0
        %654 = vmatprep.subr.mxu0 0.0
        %655 = vmatpush1.xpose.msra.mxu0 0.0
        %656 = vmatprep.subr.mxu0 0.0
        %657 = vmatpush1.xpose.msra.mxu0 0.0
        %658 = vmatprep.subr.mxu0 0.0
        %659 = vmatpush1.xpose.msra.mxu0 0.0
        %660 = vmatprep.subr.mxu0 0.0
        %661 = vmatpush1.xpose.msra.mxu0 0.0
        %662 = vmatprep.subr.mxu0 0.0
        %663 = vmatpush1.xpose.msra.mxu0 0.0
        %664 = vmatprep.subr.mxu0 0.0
        %665 = vmatpush1.xpose.msra.mxu0 0.0
        %666 = vmatprep.subr.mxu0 0.0
        %667 = vmatpush1.xpose.msra.mxu0 0.0
        %668 = vmatprep.subr.mxu0 0.0
        %669 = vmatpush1.xpose.msra.mxu0 0.0
        %670 = vmatprep.subr.mxu0 0.0
        %671 = vmatpush1.xpose.msra.mxu0 0.0
        %672 = vmatprep.subr.mxu0 0.0
        %673 = vmatpush1.xpose.msra.mxu0 %v642
        %674 = vmatprep.subr.mxu0 0.0
        %675 = vmatpush1.xpose.msra.mxu0 %v640
        %676 = vmatprep.subr.mxu0 0.0
        %677 = vmatpush2.xpose.msra.mxu0 0.0
        %678 = vmatprep.subr.mxu0 0.0
        %679 = vmatpush2.xpose.msra.mxu0 0.0
        %680 = vmatprep.subr.mxu0 0.0
        %681 = vmatpush2.xpose.msra.mxu0 0.0
        %682 = vmatprep.subr.mxu0 0.0
        %683 = vmatpush2.xpose.msra.mxu0 0.0
        %684 = vmatprep.subr.mxu0 0.0
        %685 = vmatpush2.xpose.msra.mxu0 0.0
        %686 = vmatprep.subr.mxu0 0.0
        %687 = vmatpush2.xpose.msra.mxu0 0.0
        %688 = vmatprep.subr.mxu0 0.0
        %689 = vmatpush2.xpose.msra.mxu0 0.0
        %690 = vmatprep.subr.mxu0 0.0
        %691 = vmatpush2.xpose.msra.mxu0 0.0
        %692 = vmatprep.subr.mxu0 0.0
        %693 = vmatpush2.xpose.msra.mxu0 0.0
        %694 = vmatprep.subr.mxu0 0.0
        %695 = vmatpush2.xpose.msra.mxu0 0.0
        %696 = vmatprep.subr.mxu0 0.0
        %697 = vmatpush2.xpose.msra.mxu0 0.0
        %698 = vmatprep.subr.mxu0 0.0
        %699 = vmatpush2.xpose.msra.mxu0 0.0
        %700 = vmatprep.subr.mxu0 0.0
        %701 = vmatpush2.xpose.msra.mxu0 0.0
        %702 = vmatprep.subr.mxu0 0.0
        %703 = vmatpush2.xpose.msra.mxu0 0.0
        %704 = vmatprep.subr.mxu0 0.0
        %705 = vmatpush2.xpose.msra.mxu0 0.0
        %706 = vmatprep.subr.mxu0 0.0
        %707 = vmatpush2.xpose.msra.mxu0 0.0
        %708 = vmatprep.mubr.f32.mxu0 0.0
        %709 = vmatmul.mubr.f32.gmra.mxu0 %v636
        %v710 = vpop.f32.mrf.mxu0
        %v711 = vadd.f32 %v621, %v710
        %v712 = vpop.f32.mrf.mxu0
        %713 = vmatprep.mubr.f32.mxu0 0.0
        %714 = vmatmul.mubr.f32.gmra.mxu0 %v638
        %v715 = vpop.f32.mrf.mxu0
        %v716 = vadd.f32 %v622, %v715
        %v717 = vpop.f32.mrf.mxu0
        %718 = vdwg.mxu0
        %721 = vrot.lane.b32.xlu0 %v593, 96
        %v722 = vpop.permute.xlu0 %721
        %723 = vrot.lane.b32.xlu0 %v598, 96
        %v724 = vpop.permute.xlu0 %723
        %v725 = vsel %vm635, %v593, 0
        %v727 = vsel %vm635, %v598, 0
        %v729 = vsel %vm635, %v722, 0
        %v731 = vsel %vm635, %v724, 0
        %733 = vmatprep.subr.mxu0 0.0
        %734 = vmatpush1.xpose.msra.mxu0 0.0
        %735 = vmatprep.subr.mxu0 0.0
        %736 = vmatpush1.xpose.msra.mxu0 0.0
        %737 = vmatprep.subr.mxu0 0.0
        %738 = vmatpush1.xpose.msra.mxu0 0.0
        %739 = vmatprep.subr.mxu0 0.0
        %740 = vmatpush1.xpose.msra.mxu0 0.0
        %741 = vmatprep.subr.mxu0 0.0
        %742 = vmatpush1.xpose.msra.mxu0 0.0
        %743 = vmatprep.subr.mxu0 0.0
        %744 = vmatpush1.xpose.msra.mxu0 0.0
        %745 = vmatprep.subr.mxu0 0.0
        %746 = vmatpush1.xpose.msra.mxu0 0.0
        %747 = vmatprep.subr.mxu0 0.0
        %748 = vmatpush1.xpose.msra.mxu0 0.0
        %749 = vmatprep.subr.mxu0 0.0
        %750 = vmatpush1.xpose.msra.mxu0 0.0
        %751 = vmatprep.subr.mxu0 0.0
        %752 = vmatpush1.xpose.msra.mxu0 0.0
        %753 = vmatprep.subr.mxu0 0.0
        %754 = vmatpush1.xpose.msra.mxu0 0.0
        %755 = vmatprep.subr.mxu0 0.0
        %756 = vmatpush1.xpose.msra.mxu0 0.0
        %757 = vmatprep.subr.mxu0 0.0
        %758 = vmatpush1.xpose.msra.mxu0 0.0
        %759 = vmatprep.subr.mxu0 0.0
        %760 = vmatpush1.xpose.msra.mxu0 0.0
        %761 = vmatprep.subr.mxu0 0.0
        %762 = vmatpush1.xpose.msra.mxu0 %v731
        %763 = vmatprep.subr.mxu0 0.0
        %764 = vmatpush1.xpose.msra.mxu0 %v729
        %765 = vmatprep.subr.mxu0 0.0
        %766 = vmatpush2.xpose.msra.mxu0 0.0
        %767 = vmatprep.subr.mxu0 0.0
        %768 = vmatpush2.xpose.msra.mxu0 0.0
        %769 = vmatprep.subr.mxu0 0.0
        %770 = vmatpush2.xpose.msra.mxu0 0.0
        %771 = vmatprep.subr.mxu0 0.0
        %772 = vmatpush2.xpose.msra.mxu0 0.0
        %773 = vmatprep.subr.mxu0 0.0
        %774 = vmatpush2.xpose.msra.mxu0 0.0
        %775 = vmatprep.subr.mxu0 0.0
        %776 = vmatpush2.xpose.msra.mxu0 0.0
        %777 = vmatprep.subr.mxu0 0.0
        %778 = vmatpush2.xpose.msra.mxu0 0.0
        %779 = vmatprep.subr.mxu0 0.0
        %780 = vmatpush2.xpose.msra.mxu0 0.0
        %781 = vmatprep.subr.mxu0 0.0
        %782 = vmatpush2.xpose.msra.mxu0 0.0
        %783 = vmatprep.subr.mxu0 0.0
        %784 = vmatpush2.xpose.msra.mxu0 0.0
        %785 = vmatprep.subr.mxu0 0.0
        %786 = vmatpush2.xpose.msra.mxu0 0.0
        %787 = vmatprep.subr.mxu0 0.0
        %788 = vmatpush2.xpose.msra.mxu0 0.0
        %789 = vmatprep.subr.mxu0 0.0
        %790 = vmatpush2.xpose.msra.mxu0 0.0
        %791 = vmatprep.subr.mxu0 0.0
        %792 = vmatpush2.xpose.msra.mxu0 0.0
        %793 = vmatprep.subr.mxu0 0.0
        %794 = vmatpush2.xpose.msra.mxu0 0.0
        %795 = vmatprep.subr.mxu0 0.0
        %796 = vmatpush2.xpose.msra.mxu0 0.0
        %797 = vmatprep.mubr.f32.mxu0 0.0
        %798 = vmatmul.mubr.f32.gmra.mxu0 %v725
        %v799 = vpop.f32.mrf.mxu0
        %v800 = vadd.f32 %v623, %v799
        %v801 = vpop.f32.mrf.mxu0
        %802 = vmatprep.mubr.f32.mxu0 0.0
        %803 = vmatmul.mubr.f32.gmra.mxu0 %v727
        %v804 = vpop.f32.mrf.mxu0
        %v805 = vadd.f32 %v624, %v804
        %v806 = vpop.f32.mrf.mxu0
        %807 = vdwg.mxu0
        %810 = vrot.lane.b32.xlu0 %v603, 96
        %v811 = vpop.permute.xlu0 %810
        %812 = vrot.lane.b32.xlu0 %v608, 96
        %v813 = vpop.permute.xlu0 %812
        %v814 = vsel %vm635, %v603, 0
        %v816 = vsel %vm635, %v608, 0
        %v818 = vsel %vm635, %v811, 0
        %v820 = vsel %vm635, %v813, 0
        %822 = vmatprep.subr.mxu0 0.0
        %823 = vmatpush1.xpose.msra.mxu0 0.0
        %824 = vmatprep.subr.mxu0 0.0
        %825 = vmatpush1.xpose.msra.mxu0 0.0
        %826 = vmatprep.subr.mxu0 0.0
        %827 = vmatpush1.xpose.msra.mxu0 0.0
        %828 = vmatprep.subr.mxu0 0.0
        %829 = vmatpush1.xpose.msra.mxu0 0.0
        %830 = vmatprep.subr.mxu0 0.0
        %831 = vmatpush1.xpose.msra.mxu0 0.0
        %832 = vmatprep.subr.mxu0 0.0
        %833 = vmatpush1.xpose.msra.mxu0 0.0
        %834 = vmatprep.subr.mxu0 0.0
        %835 = vmatpush1.xpose.msra.mxu0 0.0
        %836 = vmatprep.subr.mxu0 0.0
        %837 = vmatpush1.xpose.msra.mxu0 0.0
        %838 = vmatprep.subr.mxu0 0.0
        %839 = vmatpush1.xpose.msra.mxu0 0.0
        %840 = vmatprep.subr.mxu0 0.0
        %841 = vmatpush1.xpose.msra.mxu0 0.0
        %842 = vmatprep.subr.mxu0 0.0
        %843 = vmatpush1.xpose.msra.mxu0 0.0
        %844 = vmatprep.subr.mxu0 0.0
        %845 = vmatpush1.xpose.msra.mxu0 0.0
        %846 = vmatprep.subr.mxu0 0.0
        %847 = vmatpush1.xpose.msra.mxu0 0.0
        %848 = vmatprep.subr.mxu0 0.0
        %849 = vmatpush1.xpose.msra.mxu0 0.0
        %850 = vmatprep.subr.mxu0 0.0
        %851 = vmatpush1.xpose.msra.mxu0 %v820
        %852 = vmatprep.subr.mxu0 0.0
        %853 = vmatpush1.xpose.msra.mxu0 %v818
        %854 = vmatprep.subr.mxu0 0.0
        %855 = vmatpush2.xpose.msra.mxu0 0.0
        %856 = vmatprep.subr.mxu0 0.0
        %857 = vmatpush2.xpose.msra.mxu0 0.0
        %858 = vmatprep.subr.mxu0 0.0
        %859 = vmatpush2.xpose.msra.mxu0 0.0
        %860 = vmatprep.subr.mxu0 0.0
        %861 = vmatpush2.xpose.msra.mxu0 0.0
        %862 = vmatprep.subr.mxu0 0.0
        %863 = vmatpush2.xpose.msra.mxu0 0.0
        %864 = vmatprep.subr.mxu0 0.0
        %865 = vmatpush2.xpose.msra.mxu0 0.0
        %866 = vmatprep.subr.mxu0 0.0
        %867 = vmatpush2.xpose.msra.mxu0 0.0
        %868 = vmatprep.subr.mxu0 0.0
        %869 = vmatpush2.xpose.msra.mxu0 0.0
        %870 = vmatprep.subr.mxu0 0.0
        %871 = vmatpush2.xpose.msra.mxu0 0.0
        %872 = vmatprep.subr.mxu0 0.0
        %873 = vmatpush2.xpose.msra.mxu0 0.0
        %874 = vmatprep.subr.mxu0 0.0
        %875 = vmatpush2.xpose.msra.mxu0 0.0
        %876 = vmatprep.subr.mxu0 0.0
        %877 = vmatpush2.xpose.msra.mxu0 0.0
        %878 = vmatprep.subr.mxu0 0.0
        %879 = vmatpush2.xpose.msra.mxu0 0.0
        %880 = vmatprep.subr.mxu0 0.0
        %881 = vmatpush2.xpose.msra.mxu0 0.0
        %882 = vmatprep.subr.mxu0 0.0
        %883 = vmatpush2.xpose.msra.mxu0 0.0
        %884 = vmatprep.subr.mxu0 0.0
        %885 = vmatpush2.xpose.msra.mxu0 0.0
        %886 = vmatprep.mubr.f32.mxu0 0.0
        %887 = vmatmul.mubr.f32.gmra.mxu0 %v814
        %v888 = vpop.f32.mrf.mxu0
        %v889 = vadd.f32 %v625, %v888
        %v890 = vpop.f32.mrf.mxu0
        %891 = vmatprep.mubr.f32.mxu0 0.0
        %892 = vmatmul.mubr.f32.gmra.mxu0 %v816
        %v893 = vpop.f32.mrf.mxu0
        %v894 = vadd.f32 %v626, %v893
        %v895 = vpop.f32.mrf.mxu0
        %896 = vdwg.mxu0
        %899 = vrot.lane.b32.xlu0 %v613, 96
        %v900 = vpop.permute.xlu0 %899
        %901 = vrot.lane.b32.xlu0 %v618, 96
        %v902 = vpop.permute.xlu0 %901
        %v903 = vsel %vm635, %v613, 0
        %v905 = vsel %vm635, %v618, 0
        %v907 = vsel %vm635, %v900, 0
        %v909 = vsel %vm635, %v902, 0
        %911 = vmatprep.subr.mxu0 0.0
        %912 = vmatpush1.xpose.msra.mxu0 0.0
        %913 = vmatprep.subr.mxu0 0.0
        %914 = vmatpush1.xpose.msra.mxu0 0.0
        %915 = vmatprep.subr.mxu0 0.0
        %916 = vmatpush1.xpose.msra.mxu0 0.0
        %917 = vmatprep.subr.mxu0 0.0
        %918 = vmatpush1.xpose.msra.mxu0 0.0
        %919 = vmatprep.subr.mxu0 0.0
        %920 = vmatpush1.xpose.msra.mxu0 0.0
        %921 = vmatprep.subr.mxu0 0.0
        %922 = vmatpush1.xpose.msra.mxu0 0.0
        %923 = vmatprep.subr.mxu0 0.0
        %924 = vmatpush1.xpose.msra.mxu0 0.0
        %925 = vmatprep.subr.mxu0 0.0
        %926 = vmatpush1.xpose.msra.mxu0 0.0
        %927 = vmatprep.subr.mxu0 0.0
        %928 = vmatpush1.xpose.msra.mxu0 0.0
        %929 = vmatprep.subr.mxu0 0.0
        %930 = vmatpush1.xpose.msra.mxu0 0.0
        %931 = vmatprep.subr.mxu0 0.0
        %932 = vmatpush1.xpose.msra.mxu0 0.0
        %933 = vmatprep.subr.mxu0 0.0
        %934 = vmatpush1.xpose.msra.mxu0 0.0
        %935 = vmatprep.subr.mxu0 0.0
        %936 = vmatpush1.xpose.msra.mxu0 0.0
        %937 = vmatprep.subr.mxu0 0.0
        %938 = vmatpush1.xpose.msra.mxu0 0.0
        %939 = vmatprep.subr.mxu0 0.0
        %940 = vmatpush1.xpose.msra.mxu0 %v909
        %941 = vmatprep.subr.mxu0 0.0
        %942 = vmatpush1.xpose.msra.mxu0 %v907
        %943 = vmatprep.subr.mxu0 0.0
        %944 = vmatpush2.xpose.msra.mxu0 0.0
        %945 = vmatprep.subr.mxu0 0.0
        %946 = vmatpush2.xpose.msra.mxu0 0.0
        %947 = vmatprep.subr.mxu0 0.0
        %948 = vmatpush2.xpose.msra.mxu0 0.0
        %949 = vmatprep.subr.mxu0 0.0
        %950 = vmatpush2.xpose.msra.mxu0 0.0
        %951 = vmatprep.subr.mxu0 0.0
        %952 = vmatpush2.xpose.msra.mxu0 0.0
        %953 = vmatprep.subr.mxu0 0.0
        %954 = vmatpush2.xpose.msra.mxu0 0.0
        %955 = vmatprep.subr.mxu0 0.0
        %956 = vmatpush2.xpose.msra.mxu0 0.0
        %957 = vmatprep.subr.mxu0 0.0
        %958 = vmatpush2.xpose.msra.mxu0 0.0
        %959 = vmatprep.subr.mxu0 0.0
        %960 = vmatpush2.xpose.msra.mxu0 0.0
        %961 = vmatprep.subr.mxu0 0.0
        %962 = vmatpush2.xpose.msra.mxu0 0.0
        %963 = vmatprep.subr.mxu0 0.0
        %964 = vmatpush2.xpose.msra.mxu0 0.0
        %965 = vmatprep.subr.mxu0 0.0
        %966 = vmatpush2.xpose.msra.mxu0 0.0
        %967 = vmatprep.subr.mxu0 0.0
        %968 = vmatpush2.xpose.msra.mxu0 0.0
        %969 = vmatprep.subr.mxu0 0.0
        %970 = vmatpush2.xpose.msra.mxu0 0.0
        %971 = vmatprep.subr.mxu0 0.0
        %972 = vmatpush2.xpose.msra.mxu0 0.0
        %973 = vmatprep.subr.mxu0 0.0
        %974 = vmatpush2.xpose.msra.mxu0 0.0
        %975 = vmatprep.mubr.f32.mxu0 0.0
        %976 = vmatmul.mubr.f32.gmra.mxu0 %v903
        %v977 = vpop.f32.mrf.mxu0
        %v978 = vadd.f32 %v627, %v977
        %v979 = vpop.f32.mrf.mxu0
        %980 = vmatprep.mubr.f32.mxu0 0.0
        %981 = vmatmul.mubr.f32.gmra.mxu0 %v905
        %v982 = vpop.f32.mrf.mxu0
        %v983 = vadd.f32 %v628, %v982
        %v984 = vpop.f32.mrf.mxu0
        %985 = vdwg.mxu0
        %v986 = vsel %vm635, %v711, -inf
        %987 = vmax.xlane.f32.xlu0 %v986
        %v988 = vpop.xlane.xlu0 %987
        %v989 = vsel %vm635, %v716, -inf
        %990 = vmax.xlane.f32.xlu0 %v989
        %v991 = vpop.xlane.xlu0 %990
        %v992 = vsel %vm635, %v800, -inf
        %993 = vmax.xlane.f32.xlu0 %v992
        %v994 = vpop.xlane.xlu0 %993
        %v995 = vsel %vm635, %v805, -inf
        %996 = vmax.xlane.f32.xlu0 %v995
        %v997 = vpop.xlane.xlu0 %996
        %v998 = vsel %vm635, %v889, -inf
        %999 = vmax.xlane.f32.xlu0 %v998
        %v1000 = vpop.xlane.xlu0 %999
        %v1001 = vsel %vm635, %v894, -inf
        %1002 = vmax.xlane.f32.xlu0 %v1001
        %v1003 = vpop.xlane.xlu0 %1002
        %v1004 = vsel %vm635, %v978, -inf
        %1005 = vmax.xlane.f32.xlu0 %v1004
        %v1006 = vpop.xlane.xlu0 %1005
        %v1007 = vsel %vm635, %v983, -inf
        %1008 = vmax.xlane.f32.xlu0 %v1007
        %v1009 = vpop.xlane.xlu0 %1008
        %v1010 = vsub.f32 %v711, %v988
        %v1011 = vsub.f32 %v716, %v991
        %v1012 = vsub.f32 %v800, %v994
        %v1013 = vsub.f32 %v805, %v997
        %v1014 = vsub.f32 %v889, %v1000
        %v1015 = vsub.f32 %v894, %v1003
        %v1016 = vsub.f32 %v978, %v1006
        %v1017 = vsub.f32 %v983, %v1009
        %v1018 = vmul.f32 %v1010, 1.442695
        %v1019 = vpow.pop %v1018
        %v1020 = vmul.f32 %v1011, 1.442695
        %v1021 = vpow.pop %v1020
        %v1022 = vmul.f32 %v1012, 1.442695
        %v1023 = vpow.pop %v1022
        %v1024 = vmul.f32 %v1013, 1.442695
        %v1025 = vpow.pop %v1024
        %v1026 = vmul.f32 %v1014, 1.442695
        %v1027 = vpow.pop %v1026
        %v1028 = vmul.f32 %v1015, 1.442695
        %v1029 = vpow.pop %v1028
        %v1030 = vmul.f32 %v1016, 1.442695
        %v1031 = vpow.pop %v1030
        %v1032 = vmul.f32 %v1017, 1.442695
        %v1033 = vpow.pop %v1032
        %v1034 = vsel %vm635, %v1019, 0.0
        %1035 = vadd.xlane.f32.xlu0 %v1034
        %v1036 = vpop.xlane.xlu0 %1035
        %v1037 = vsel %vm635, %v1021, 0.0
        %1038 = vadd.xlane.f32.xlu0 %v1037
        %v1039 = vpop.xlane.xlu0 %1038
        %v1040 = vsel %vm635, %v1023, 0.0
        %1041 = vadd.xlane.f32.xlu0 %v1040
        %v1042 = vpop.xlane.xlu0 %1041
        %v1043 = vsel %vm635, %v1025, 0.0
        %1044 = vadd.xlane.f32.xlu0 %v1043
        %v1045 = vpop.xlane.xlu0 %1044
        %v1046 = vsel %vm635, %v1027, 0.0
        %1047 = vadd.xlane.f32.xlu0 %v1046
        %v1048 = vpop.xlane.xlu0 %1047
        %v1049 = vsel %vm635, %v1029, 0.0
        %1050 = vadd.xlane.f32.xlu0 %v1049
        %v1051 = vpop.xlane.xlu0 %1050
        %v1052 = vsel %vm635, %v1031, 0.0
        %1053 = vadd.xlane.f32.xlu0 %v1052
        %v1054 = vpop.xlane.xlu0 %1053
        %v1055 = vsel %vm635, %v1033, 0.0
        %1056 = vadd.xlane.f32.xlu0 %v1055
        %v1057 = vpop.xlane.xlu0 %1056
        %v1058 = vrcp.pop %v1036
        %v1059 = vrcp.pop %v1039
        %v1060 = vrcp.pop %v1042
        %v1061 = vrcp.pop %v1045
        %v1062 = vrcp.pop %v1048
        %v1063 = vrcp.pop %v1051
        %v1064 = vrcp.pop %v1054
        %v1065 = vrcp.pop %v1057
        %v1066 = vmul.f32 %v1019, %v1058
        %v1067 = vmul.f32 %v1021, %v1059
        %v1068 = vmul.f32 %v1023, %v1060
        %v1069 = vmul.f32 %v1025, %v1061
        %v1070 = vmul.f32 %v1027, %v1062
        %v1071 = vmul.f32 %v1029, %v1063
        %v1072 = vmul.f32 %v1031, %v1064
        %v1073 = vmul.f32 %v1033, %v1065
        %1074 = vrot.lane.b32.xlu0 %v583, 64
        %v1075 = vpop.permute.xlu0 %1074
        %1076 = vrot.lane.b32.xlu0 %v588, 64
        %v1077 = vpop.permute.xlu0 %1076
        %v1081 = vsel %vm635, %v1066, 0
        %v1084 = vsel %vm635, %v1067, 0
        %1086 = vmatprep.subr.mxu0 0.0
        %1087 = vmatpush1.msra.mxu0 0.0
        %1088 = vmatprep.subr.mxu0 0.0
        %1089 = vmatpush1.msra.mxu0 0.0
        %1090 = vmatprep.subr.mxu0 0.0
        %1091 = vmatpush1.msra.mxu0 0.0
        %1092 = vmatprep.subr.mxu0 0.0
        %1093 = vmatpush1.msra.mxu0 0.0
        %1094 = vmatprep.subr.mxu0 0.0
        %1095 = vmatpush1.msra.mxu0 0.0
        %1096 = vmatprep.subr.mxu0 0.0
        %1097 = vmatpush1.msra.mxu0 0.0
        %1098 = vmatprep.subr.mxu0 0.0
        %1099 = vmatpush1.msra.mxu0 0.0
        %1100 = vmatprep.subr.mxu0 0.0
        %1101 = vmatpush1.msra.mxu0 0.0
        %1102 = vmatprep.subr.mxu0 0.0
        %1103 = vmatpush1.msra.mxu0 0.0
        %1104 = vmatprep.subr.mxu0 0.0
        %1105 = vmatpush1.msra.mxu0 0.0
        %1106 = vmatprep.subr.mxu0 0.0
        %1107 = vmatpush1.msra.mxu0 0.0
        %1108 = vmatprep.subr.mxu0 0.0
        %1109 = vmatpush1.msra.mxu0 0.0
        %1110 = vmatprep.subr.mxu0 0.0
        %1111 = vmatpush1.msra.mxu0 0.0
        %1112 = vmatprep.subr.mxu0 0.0
        %1113 = vmatpush1.msra.mxu0 0.0
        %1114 = vmatprep.subr.mxu0 0.0
        %1115 = vmatpush1.msra.mxu0 %v1077
        %1116 = vmatprep.subr.mxu0 0.0
        %1117 = vmatpush1.msra.mxu0 %v1075
        %1118 = vmatprep.subr.mxu0 0.0
        %1119 = vmatpush2.msra.mxu0 0.0
        %1120 = vmatprep.subr.mxu0 0.0
        %1121 = vmatpush2.msra.mxu0 0.0
        %1122 = vmatprep.subr.mxu0 0.0
        %1123 = vmatpush2.msra.mxu0 0.0
        %1124 = vmatprep.subr.mxu0 0.0
        %1125 = vmatpush2.msra.mxu0 0.0
        %1126 = vmatprep.subr.mxu0 0.0
        %1127 = vmatpush2.msra.mxu0 0.0
        %1128 = vmatprep.subr.mxu0 0.0
        %1129 = vmatpush2.msra.mxu0 0.0
        %1130 = vmatprep.subr.mxu0 0.0
        %1131 = vmatpush2.msra.mxu0 0.0
        %1132 = vmatprep.subr.mxu0 0.0
        %1133 = vmatpush2.msra.mxu0 0.0
        %1134 = vmatprep.subr.mxu0 0.0
        %1135 = vmatpush2.msra.mxu0 0.0
        %1136 = vmatprep.subr.mxu0 0.0
        %1137 = vmatpush2.msra.mxu0 0.0
        %1138 = vmatprep.subr.mxu0 0.0
        %1139 = vmatpush2.msra.mxu0 0.0
        %1140 = vmatprep.subr.mxu0 0.0
        %1141 = vmatpush2.msra.mxu0 0.0
        %1142 = vmatprep.subr.mxu0 0.0
        %1143 = vmatpush2.msra.mxu0 0.0
        %1144 = vmatprep.subr.mxu0 0.0
        %1145 = vmatpush2.msra.mxu0 0.0
        %1146 = vmatprep.subr.mxu0 0.0
        %1147 = vmatpush2.msra.mxu0 0.0
        %1148 = vmatprep.subr.mxu0 0.0
        %1149 = vmatpush2.msra.mxu0 0.0
        %1150 = vmatprep.mubr.f32.mxu0 0.0
        %1151 = vmatmul.mubr.f32.gmra.mxu0 %v1081
        %v1152 = vpop.f32.mrf.mxu0
        %v1153 = vadd.f32 0.0, %v1152
        %v1154 = vpop.f32.mrf.mxu0
        %1155 = vmatprep.mubr.f32.mxu0 0.0
        %1156 = vmatmul.mubr.f32.gmra.mxu0 %v1084
        %v1157 = vpop.f32.mrf.mxu0
        %v1158 = vadd.f32 0.0, %v1157
        %v1159 = vpop.f32.mrf.mxu0
        %1160 = vdwg.mxu0
        %1161 = vrot.lane.b32.xlu0 %v593, 64
        %v1162 = vpop.permute.xlu0 %1161
        %1163 = vrot.lane.b32.xlu0 %v598, 64
        %v1164 = vpop.permute.xlu0 %1163
        %v1168 = vsel %vm635, %v1068, 0
        %v1171 = vsel %vm635, %v1069, 0
        %1173 = vmatprep.subr.mxu0 0.0
        %1174 = vmatpush1.msra.mxu0 0.0
        %1175 = vmatprep.subr.mxu0 0.0
        %1176 = vmatpush1.msra.mxu0 0.0
        %1177 = vmatprep.subr.mxu0 0.0
        %1178 = vmatpush1.msra.mxu0 0.0
        %1179 = vmatprep.subr.mxu0 0.0
        %1180 = vmatpush1.msra.mxu0 0.0
        %1181 = vmatprep.subr.mxu0 0.0
        %1182 = vmatpush1.msra.mxu0 0.0
        %1183 = vmatprep.subr.mxu0 0.0
        %1184 = vmatpush1.msra.mxu0 0.0
        %1185 = vmatprep.subr.mxu0 0.0
        %1186 = vmatpush1.msra.mxu0 0.0
        %1187 = vmatprep.subr.mxu0 0.0
        %1188 = vmatpush1.msra.mxu0 0.0
        %1189 = vmatprep.subr.mxu0 0.0
        %1190 = vmatpush1.msra.mxu0 0.0
        %1191 = vmatprep.subr.mxu0 0.0
        %1192 = vmatpush1.msra.mxu0 0.0
        %1193 = vmatprep.subr.mxu0 0.0
        %1194 = vmatpush1.msra.mxu0 0.0
        %1195 = vmatprep.subr.mxu0 0.0
        %1196 = vmatpush1.msra.mxu0 0.0
        %1197 = vmatprep.subr.mxu0 0.0
        %1198 = vmatpush1.msra.mxu0 0.0
        %1199 = vmatprep.subr.mxu0 0.0
        %1200 = vmatpush1.msra.mxu0 0.0
        %1201 = vmatprep.subr.mxu0 0.0
        %1202 = vmatpush1.msra.mxu0 %v1164
        %1203 = vmatprep.subr.mxu0 0.0
        %1204 = vmatpush1.msra.mxu0 %v1162
        %1205 = vmatprep.subr.mxu0 0.0
        %1206 = vmatpush2.msra.mxu0 0.0
        %1207 = vmatprep.subr.mxu0 0.0
        %1208 = vmatpush2.msra.mxu0 0.0
        %1209 = vmatprep.subr.mxu0 0.0
        %1210 = vmatpush2.msra.mxu0 0.0
        %1211 = vmatprep.subr.mxu0 0.0
        %1212 = vmatpush2.msra.mxu0 0.0
        %1213 = vmatprep.subr.mxu0 0.0
        %1214 = vmatpush2.msra.mxu0 0.0
        %1215 = vmatprep.subr.mxu0 0.0
        %1216 = vmatpush2.msra.mxu0 0.0
        %1217 = vmatprep.subr.mxu0 0.0
        %1218 = vmatpush2.msra.mxu0 0.0
        %1219 = vmatprep.subr.mxu0 0.0
        %1220 = vmatpush2.msra.mxu0 0.0
        %1221 = vmatprep.subr.mxu0 0.0
        %1222 = vmatpush2.msra.mxu0 0.0
        %1223 = vmatprep.subr.mxu0 0.0
        %1224 = vmatpush2.msra.mxu0 0.0
        %1225 = vmatprep.subr.mxu0 0.0
        %1226 = vmatpush2.msra.mxu0 0.0
        %1227 = vmatprep.subr.mxu0 0.0
        %1228 = vmatpush2.msra.mxu0 0.0
        %1229 = vmatprep.subr.mxu0 0.0
        %1230 = vmatpush2.msra.mxu0 0.0
        %1231 = vmatprep.subr.mxu0 0.0
        %1232 = vmatpush2.msra.mxu0 0.0
        %1233 = vmatprep.subr.mxu0 0.0
        %1234 = vmatpush2.msra.mxu0 0.0
        %1235 = vmatprep.subr.mxu0 0.0
        %1236 = vmatpush2.msra.mxu0 0.0
        %1237 = vmatprep.mubr.f32.mxu0 0.0
        %1238 = vmatmul.mubr.f32.gmra.mxu0 %v1168
        %v1239 = vpop.f32.mrf.mxu0
        %v1240 = vadd.f32 0.0, %v1239
        %v1241 = vpop.f32.mrf.mxu0
        %1242 = vmatprep.mubr.f32.mxu0 0.0
        %1243 = vmatmul.mubr.f32.gmra.mxu0 %v1171
        %v1244 = vpop.f32.mrf.mxu0
        %v1245 = vadd.f32 0.0, %v1244
        %v1246 = vpop.f32.mrf.mxu0
        %1247 = vdwg.mxu0
        %1248 = vrot.lane.b32.xlu0 %v603, 64
        %v1249 = vpop.permute.xlu0 %1248
        %1250 = vrot.lane.b32.xlu0 %v608, 64
        %v1251 = vpop.permute.xlu0 %1250
        %v1255 = vsel %vm635, %v1070, 0
        %v1258 = vsel %vm635, %v1071, 0
        %1260 = vmatprep.subr.mxu0 0.0
        %1261 = vmatpush1.msra.mxu0 0.0
        %1262 = vmatprep.subr.mxu0 0.0
        %1263 = vmatpush1.msra.mxu0 0.0
        %1264 = vmatprep.subr.mxu0 0.0
        %1265 = vmatpush1.msra.mxu0 0.0
        %1266 = vmatprep.subr.mxu0 0.0
        %1267 = vmatpush1.msra.mxu0 0.0
        %1268 = vmatprep.subr.mxu0 0.0
        %1269 = vmatpush1.msra.mxu0 0.0
        %1270 = vmatprep.subr.mxu0 0.0
        %1271 = vmatpush1.msra.mxu0 0.0
        %1272 = vmatprep.subr.mxu0 0.0
        %1273 = vmatpush1.msra.mxu0 0.0
        %1274 = vmatprep.subr.mxu0 0.0
        %1275 = vmatpush1.msra.mxu0 0.0
        %1276 = vmatprep.subr.mxu0 0.0
        %1277 = vmatpush1.msra.mxu0 0.0
        %1278 = vmatprep.subr.mxu0 0.0
        %1279 = vmatpush1.msra.mxu0 0.0
        %1280 = vmatprep.subr.mxu0 0.0
        %1281 = vmatpush1.msra.mxu0 0.0
        %1282 = vmatprep.subr.mxu0 0.0
        %1283 = vmatpush1.msra.mxu0 0.0
        %1284 = vmatprep.subr.mxu0 0.0
        %1285 = vmatpush1.msra.mxu0 0.0
        %1286 = vmatprep.subr.mxu0 0.0
        %1287 = vmatpush1.msra.mxu0 0.0
        %1288 = vmatprep.subr.mxu0 0.0
        %1289 = vmatpush1.msra.mxu0 %v1251
        %1290 = vmatprep.subr.mxu0 0.0
        %1291 = vmatpush1.msra.mxu0 %v1249
        %1292 = vmatprep.subr.mxu0 0.0
        %1293 = vmatpush2.msra.mxu0 0.0
        %1294 = vmatprep.subr.mxu0 0.0
        %1295 = vmatpush2.msra.mxu0 0.0
        %1296 = vmatprep.subr.mxu0 0.0
        %1297 = vmatpush2.msra.mxu0 0.0
        %1298 = vmatprep.subr.mxu0 0.0
        %1299 = vmatpush2.msra.mxu0 0.0
        %1300 = vmatprep.subr.mxu0 0.0
        %1301 = vmatpush2.msra.mxu0 0.0
        %1302 = vmatprep.subr.mxu0 0.0
        %1303 = vmatpush2.msra.mxu0 0.0
        %1304 = vmatprep.subr.mxu0 0.0
        %1305 = vmatpush2.msra.mxu0 0.0
        %1306 = vmatprep.subr.mxu0 0.0
        %1307 = vmatpush2.msra.mxu0 0.0
        %1308 = vmatprep.subr.mxu0 0.0
        %1309 = vmatpush2.msra.mxu0 0.0
        %1310 = vmatprep.subr.mxu0 0.0
        %1311 = vmatpush2.msra.mxu0 0.0
        %1312 = vmatprep.subr.mxu0 0.0
        %1313 = vmatpush2.msra.mxu0 0.0
        %1314 = vmatprep.subr.mxu0 0.0
        %1315 = vmatpush2.msra.mxu0 0.0
        %1316 = vmatprep.subr.mxu0 0.0
        %1317 = vmatpush2.msra.mxu0 0.0
        %1318 = vmatprep.subr.mxu0 0.0
        %1319 = vmatpush2.msra.mxu0 0.0
        %1320 = vmatprep.subr.mxu0 0.0
        %1321 = vmatpush2.msra.mxu0 0.0
        %1322 = vmatprep.subr.mxu0 0.0
        %1323 = vmatpush2.msra.mxu0 0.0
        %1324 = vmatprep.mubr.f32.mxu0 0.0
        %1325 = vmatmul.mubr.f32.gmra.mxu0 %v1255
        %v1326 = vpop.f32.mrf.mxu0
        %v1327 = vadd.f32 0.0, %v1326
        %v1328 = vpop.f32.mrf.mxu0
        %1329 = vmatprep.mubr.f32.mxu0 0.0
        %1330 = vmatmul.mubr.f32.gmra.mxu0 %v1258
        %v1331 = vpop.f32.mrf.mxu0
        %v1332 = vadd.f32 0.0, %v1331
        %v1333 = vpop.f32.mrf.mxu0
        %1334 = vdwg.mxu0
        %1335 = vrot.lane.b32.xlu0 %v613, 64
        %v1336 = vpop.permute.xlu0 %1335
        %1337 = vrot.lane.b32.xlu0 %v618, 64
        %v1338 = vpop.permute.xlu0 %1337
        %v1342 = vsel %vm635, %v1072, 0
        %v1345 = vsel %vm635, %v1073, 0
        %1347 = vmatprep.subr.mxu0 0.0
        %1348 = vmatpush1.msra.mxu0 0.0
        %1349 = vmatprep.subr.mxu0 0.0
        %1350 = vmatpush1.msra.mxu0 0.0
        %1351 = vmatprep.subr.mxu0 0.0
        %1352 = vmatpush1.msra.mxu0 0.0
        %1353 = vmatprep.subr.mxu0 0.0
        %1354 = vmatpush1.msra.mxu0 0.0
        %1355 = vmatprep.subr.mxu0 0.0
        %1356 = vmatpush1.msra.mxu0 0.0
        %1357 = vmatprep.subr.mxu0 0.0
        %1358 = vmatpush1.msra.mxu0 0.0
        %1359 = vmatprep.subr.mxu0 0.0
        %1360 = vmatpush1.msra.mxu0 0.0
        %1361 = vmatprep.subr.mxu0 0.0
        %1362 = vmatpush1.msra.mxu0 0.0
        %1363 = vmatprep.subr.mxu0 0.0
        %1364 = vmatpush1.msra.mxu0 0.0
        %1365 = vmatprep.subr.mxu0 0.0
        %1366 = vmatpush1.msra.mxu0 0.0
        %1367 = vmatprep.subr.mxu0 0.0
        %1368 = vmatpush1.msra.mxu0 0.0
        %1369 = vmatprep.subr.mxu0 0.0
        %1370 = vmatpush1.msra.mxu0 0.0
        %1371 = vmatprep.subr.mxu0 0.0
        %1372 = vmatpush1.msra.mxu0 0.0
        %1373 = vmatprep.subr.mxu0 0.0
        %1374 = vmatpush1.msra.mxu0 0.0
        %1375 = vmatprep.subr.mxu0 0.0
        %1376 = vmatpush1.msra.mxu0 %v1338
        %1377 = vmatprep.subr.mxu0 0.0
        %1378 = vmatpush1.msra.mxu0 %v1336
        %1379 = vmatprep.subr.mxu0 0.0
        %1380 = vmatpush2.msra.mxu0 0.0
        %1381 = vmatprep.subr.mxu0 0.0
        %1382 = vmatpush2.msra.mxu0 0.0
        %1383 = vmatprep.subr.mxu0 0.0
        %1384 = vmatpush2.msra.mxu0 0.0
        %1385 = vmatprep.subr.mxu0 0.0
        %1386 = vmatpush2.msra.mxu0 0.0
        %1387 = vmatprep.subr.mxu0 0.0
        %1388 = vmatpush2.msra.mxu0 0.0
        %1389 = vmatprep.subr.mxu0 0.0
        %1390 = vmatpush2.msra.mxu0 0.0
        %1391 = vmatprep.subr.mxu0 0.0
        %1392 = vmatpush2.msra.mxu0 0.0
        %1393 = vmatprep.subr.mxu0 0.0
        %1394 = vmatpush2.msra.mxu0 0.0
        %1395 = vmatprep.subr.mxu0 0.0
        %1396 = vmatpush2.msra.mxu0 0.0
        %1397 = vmatprep.subr.mxu0 0.0
        %1398 = vmatpush2.msra.mxu0 0.0
        %1399 = vmatprep.subr.mxu0 0.0
        %1400 = vmatpush2.msra.mxu0 0.0
        %1401 = vmatprep.subr.mxu0 0.0
        %1402 = vmatpush2.msra.mxu0 0.0
        %1403 = vmatprep.subr.mxu0 0.0
        %1404 = vmatpush2.msra.mxu0 0.0
        %1405 = vmatprep.subr.mxu0 0.0
        %1406 = vmatpush2.msra.mxu0 0.0
        %1407 = vmatprep.subr.mxu0 0.0
        %1408 = vmatpush2.msra.mxu0 0.0
        %1409 = vmatprep.subr.mxu0 0.0
        %1410 = vmatpush2.msra.mxu0 0.0
        %1411 = vmatprep.mubr.f32.mxu0 0.0
        %1412 = vmatmul.mubr.f32.gmra.mxu0 %v1342
        %v1413 = vpop.f32.mrf.mxu0
        %v1414 = vadd.f32 0.0, %v1413
        %v1415 = vpop.f32.mrf.mxu0
        %1416 = vmatprep.mubr.f32.mxu0 0.0
        %1417 = vmatmul.mubr.f32.gmra.mxu0 %v1345
        %v1418 = vpop.f32.mrf.mxu0
        %v1419 = vadd.f32 0.0, %v1418
        %v1420 = vpop.f32.mrf.mxu0
        %1421 = vdwg.mxu0
        %v1422 = vld [vmem:[#allocation8] sm:$0xff]
        %v1423 = vld [vmem:[#allocation8 + $0x8] sm:$0xff]
        %1424 = vrot.lane.b32.xlu0 %v583, 112
        %v1425 = vpop.permute.xlu0 %1424
        %1426 = vrot.lane.b32.xlu0 %v588, 112
        %v1427 = vpop.permute.xlu0 %1426
        %1428 = vrot.lane.b32.xlu0 %v583, 80
        %v1429 = vpop.permute.xlu0 %1428
        %1430 = vrot.lane.b32.xlu0 %v588, 80
        %v1431 = vpop.permute.xlu0 %1430
        %v1432 = vsel %vm635, %v1425, 0
        %v1434 = vsel %vm635, %v1427, 0
        %v1436 = vsel %vm635, %v1429, 0
        %v1438 = vsel %vm635, %v1431, 0
        %1440 = vmatprep.subr.mxu0 0.0
        %1441 = vmatpush1.xpose.msra.mxu0 0.0
        %1442 = vmatprep.subr.mxu0 0.0
        %1443 = vmatpush1.xpose.msra.mxu0 0.0
        %1444 = vmatprep.subr.mxu0 0.0
        %1445 = vmatpush1.xpose.msra.mxu0 0.0
        %1446 = vmatprep.subr.mxu0 0.0
        %1447 = vmatpush1.xpose.msra.mxu0 0.0
        %1448 = vmatprep.subr.mxu0 0.0
        %1449 = vmatpush1.xpose.msra.mxu0 0.0
        %1450 = vmatprep.subr.mxu0 0.0
        %1451 = vmatpush1.xpose.msra.mxu0 0.0
        %1452 = vmatprep.subr.mxu0 0.0
        %1453 = vmatpush1.xpose.msra.mxu0 0.0
        %1454 = vmatprep.subr.mxu0 0.0
        %1455 = vmatpush1.xpose.msra.mxu0 0.0
        %1456 = vmatprep.subr.mxu0 0.0
        %1457 = vmatpush1.xpose.msra.mxu0 0.0
        %1458 = vmatprep.subr.mxu0 0.0
        %1459 = vmatpush1.xpose.msra.mxu0 0.0
        %1460 = vmatprep.subr.mxu0 0.0
        %1461 = vmatpush1.xpose.msra.mxu0 0.0
        %1462 = vmatprep.subr.mxu0 0.0
        %1463 = vmatpush1.xpose.msra.mxu0 0.0
        %1464 = vmatprep.subr.mxu0 0.0
        %1465 = vmatpush1.xpose.msra.mxu0 0.0
        %1466 = vmatprep.subr.mxu0 0.0
        %1467 = vmatpush1.xpose.msra.mxu0 0.0
        %1468 = vmatprep.subr.mxu0 0.0
        %1469 = vmatpush1.xpose.msra.mxu0 %v1438
        %1470 = vmatprep.subr.mxu0 0.0
        %1471 = vmatpush1.xpose.msra.mxu0 %v1436
        %1472 = vmatprep.subr.mxu0 0.0
        %1473 = vmatpush2.xpose.msra.mxu0 0.0
        %1474 = vmatprep.subr.mxu0 0.0
        %1475 = vmatpush2.xpose.msra.mxu0 0.0
        %1476 = vmatprep.subr.mxu0 0.0
        %1477 = vmatpush2.xpose.msra.mxu0 0.0
        %1478 = vmatprep.subr.mxu0 0.0
        %1479 = vmatpush2.xpose.msra.mxu0 0.0
        %1480 = vmatprep.subr.mxu0 0.0
        %1481 = vmatpush2.xpose.msra.mxu0 0.0
        %1482 = vmatprep.subr.mxu0 0.0
        %1483 = vmatpush2.xpose.msra.mxu0 0.0
        %1484 = vmatprep.subr.mxu0 0.0
        %1485 = vmatpush2.xpose.msra.mxu0 0.0
        %1486 = vmatprep.subr.mxu0 0.0
        %1487 = vmatpush2.xpose.msra.mxu0 0.0
        %1488 = vmatprep.subr.mxu0 0.0
        %1489 = vmatpush2.xpose.msra.mxu0 0.0
        %1490 = vmatprep.subr.mxu0 0.0
        %1491 = vmatpush2.xpose.msra.mxu0 0.0
        %1492 = vmatprep.subr.mxu0 0.0
        %1493 = vmatpush2.xpose.msra.mxu0 0.0
        %1494 = vmatprep.subr.mxu0 0.0
        %1495 = vmatpush2.xpose.msra.mxu0 0.0
        %1496 = vmatprep.subr.mxu0 0.0
        %1497 = vmatpush2.xpose.msra.mxu0 0.0
        %1498 = vmatprep.subr.mxu0 0.0
        %1499 = vmatpush2.xpose.msra.mxu0 0.0
        %1500 = vmatprep.subr.mxu0 0.0
        %1501 = vmatpush2.xpose.msra.mxu0 0.0
        %1502 = vmatprep.subr.mxu0 0.0
        %1503 = vmatpush2.xpose.msra.mxu0 0.0
        %1504 = vmatprep.mubr.f32.mxu0 0.0
        %1505 = vmatmul.mubr.f32.gmra.mxu0 %v1432
        %v1506 = vpop.f32.mrf.mxu0
        %v1507 = vadd.f32 %v621, %v1506
        %v1508 = vpop.f32.mrf.mxu0
        %1509 = vmatprep.mubr.f32.mxu0 0.0
        %1510 = vmatmul.mubr.f32.gmra.mxu0 %v1434
        %v1511 = vpop.f32.mrf.mxu0
        %v1512 = vadd.f32 %v622, %v1511
        %v1513 = vpop.f32.mrf.mxu0
        %1514 = vdwg.mxu0
        %1515 = vrot.lane.b32.xlu0 %v593, 112
        %v1516 = vpop.permute.xlu0 %1515
        %1517 = vrot.lane.b32.xlu0 %v598, 112
        %v1518 = vpop.permute.xlu0 %1517
        %1519 = vrot.lane.b32.xlu0 %v593, 80
        %v1520 = vpop.permute.xlu0 %1519
        %1521 = vrot.lane.b32.xlu0 %v598, 80
        %v1522 = vpop.permute.xlu0 %1521
        %v1523 = vsel %vm635, %v1516, 0
        %v1525 = vsel %vm635, %v1518, 0
        %v1527 = vsel %vm635, %v1520, 0
        %v1529 = vsel %vm635, %v1522, 0
        %1531 = vmatprep.subr.mxu0 0.0
        %1532 = vmatpush1.xpose.msra.mxu0 0.0
        %1533 = vmatprep.subr.mxu0 0.0
        %1534 = vmatpush1.xpose.msra.mxu0 0.0
        %1535 = vmatprep.subr.mxu0 0.0
        %1536 = vmatpush1.xpose.msra.mxu0 0.0
        %1537 = vmatprep.subr.mxu0 0.0
        %1538 = vmatpush1.xpose.msra.mxu0 0.0
        %1539 = vmatprep.subr.mxu0 0.0
        %1540 = vmatpush1.xpose.msra.mxu0 0.0
        %1541 = vmatprep.subr.mxu0 0.0
        %1542 = vmatpush1.xpose.msra.mxu0 0.0
        %1543 = vmatprep.subr.mxu0 0.0
        %1544 = vmatpush1.xpose.msra.mxu0 0.0
        %1545 = vmatprep.subr.mxu0 0.0
        %1546 = vmatpush1.xpose.msra.mxu0 0.0
        %1547 = vmatprep.subr.mxu0 0.0
        %1548 = vmatpush1.xpose.msra.mxu0 0.0
        %1549 = vmatprep.subr.mxu0 0.0
        %1550 = vmatpush1.xpose.msra.mxu0 0.0
        %1551 = vmatprep.subr.mxu0 0.0
        %1552 = vmatpush1.xpose.msra.mxu0 0.0
        %1553 = vmatprep.subr.mxu0 0.0
        %1554 = vmatpush1.xpose.msra.mxu0 0.0
        %1555 = vmatprep.subr.mxu0 0.0
        %1556 = vmatpush1.xpose.msra.mxu0 0.0
        %1557 = vmatprep.subr.mxu0 0.0
        %1558 = vmatpush1.xpose.msra.mxu0 0.0
        %1559 = vmatprep.subr.mxu0 0.0
        %1560 = vmatpush1.xpose.msra.mxu0 %v1529
        %1561 = vmatprep.subr.mxu0 0.0
        %1562 = vmatpush1.xpose.msra.mxu0 %v1527
        %1563 = vmatprep.subr.mxu0 0.0
        %1564 = vmatpush2.xpose.msra.mxu0 0.0
        %1565 = vmatprep.subr.mxu0 0.0
        %1566 = vmatpush2.xpose.msra.mxu0 0.0
        %1567 = vmatprep.subr.mxu0 0.0
        %1568 = vmatpush2.xpose.msra.mxu0 0.0
        %1569 = vmatprep.subr.mxu0 0.0
        %1570 = vmatpush2.xpose.msra.mxu0 0.0
        %1571 = vmatprep.subr.mxu0 0.0
        %1572 = vmatpush2.xpose.msra.mxu0 0.0
        %1573 = vmatprep.subr.mxu0 0.0
        %1574 = vmatpush2.xpose.msra.mxu0 0.0
        %1575 = vmatprep.subr.mxu0 0.0
        %1576 = vmatpush2.xpose.msra.mxu0 0.0
        %1577 = vmatprep.subr.mxu0 0.0
        %1578 = vmatpush2.xpose.msra.mxu0 0.0
        %1579 = vmatprep.subr.mxu0 0.0
        %1580 = vmatpush2.xpose.msra.mxu0 0.0
        %1581 = vmatprep.subr.mxu0 0.0
        %1582 = vmatpush2.xpose.msra.mxu0 0.0
        %1583 = vmatprep.subr.mxu0 0.0
        %1584 = vmatpush2.xpose.msra.mxu0 0.0
        %1585 = vmatprep.subr.mxu0 0.0
        %1586 = vmatpush2.xpose.msra.mxu0 0.0
        %1587 = vmatprep.subr.mxu0 0.0
        %1588 = vmatpush2.xpose.msra.mxu0 0.0
        %1589 = vmatprep.subr.mxu0 0.0
        %1590 = vmatpush2.xpose.msra.mxu0 0.0
        %1591 = vmatprep.subr.mxu0 0.0
        %1592 = vmatpush2.xpose.msra.mxu0 0.0
        %1593 = vmatprep.subr.mxu0 0.0
        %1594 = vmatpush2.xpose.msra.mxu0 0.0
        %1595 = vmatprep.mubr.f32.mxu0 0.0
        %1596 = vmatmul.mubr.f32.gmra.mxu0 %v1523
        %v1597 = vpop.f32.mrf.mxu0
        %v1598 = vadd.f32 %v623, %v1597
        %v1599 = vpop.f32.mrf.mxu0
        %1600 = vmatprep.mubr.f32.mxu0 0.0
        %1601 = vmatmul.mubr.f32.gmra.mxu0 %v1525
        %v1602 = vpop.f32.mrf.mxu0
        %v1603 = vadd.f32 %v624, %v1602
        %v1604 = vpop.f32.mrf.mxu0
        %1605 = vdwg.mxu0
        %1606 = vrot.lane.b32.xlu0 %v603, 112
        %v1607 = vpop.permute.xlu0 %1606
        %1608 = vrot.lane.b32.xlu0 %v608, 112
        %v1609 = vpop.permute.xlu0 %1608
        %1610 = vrot.lane.b32.xlu0 %v603, 80
        %v1611 = vpop.permute.xlu0 %1610
        %1612 = vrot.lane.b32.xlu0 %v608, 80
        %v1613 = vpop.permute.xlu0 %1612
        %v1614 = vsel %vm635, %v1607, 0
        %v1616 = vsel %vm635, %v1609, 0
        %v1618 = vsel %vm635, %v1611, 0
        %v1620 = vsel %vm635, %v1613, 0
        %1622 = vmatprep.subr.mxu0 0.0
        %1623 = vmatpush1.xpose.msra.mxu0 0.0
        %1624 = vmatprep.subr.mxu0 0.0
        %1625 = vmatpush1.xpose.msra.mxu0 0.0
        %1626 = vmatprep.subr.mxu0 0.0
        %1627 = vmatpush1.xpose.msra.mxu0 0.0
        %1628 = vmatprep.subr.mxu0 0.0
        %1629 = vmatpush1.xpose.msra.mxu0 0.0
        %1630 = vmatprep.subr.mxu0 0.0
        %1631 = vmatpush1.xpose.msra.mxu0 0.0
        %1632 = vmatprep.subr.mxu0 0.0
        %1633 = vmatpush1.xpose.msra.mxu0 0.0
        %1634 = vmatprep.subr.mxu0 0.0
        %1635 = vmatpush1.xpose.msra.mxu0 0.0
        %1636 = vmatprep.subr.mxu0 0.0
        %1637 = vmatpush1.xpose.msra.mxu0 0.0
        %1638 = vmatprep.subr.mxu0 0.0
        %1639 = vmatpush1.xpose.msra.mxu0 0.0
        %1640 = vmatprep.subr.mxu0 0.0
        %1641 = vmatpush1.xpose.msra.mxu0 0.0
        %1642 = vmatprep.subr.mxu0 0.0
        %1643 = vmatpush1.xpose.msra.mxu0 0.0
        %1644 = vmatprep.subr.mxu0 0.0
        %1645 = vmatpush1.xpose.msra.mxu0 0.0
        %1646 = vmatprep.subr.mxu0 0.0
        %1647 = vmatpush1.xpose.msra.mxu0 0.0
        %1648 = vmatprep.subr.mxu0 0.0
        %1649 = vmatpush1.xpose.msra.mxu0 0.0
        %1650 = vmatprep.subr.mxu0 0.0
        %1651 = vmatpush1.xpose.msra.mxu0 %v1620
        %1652 = vmatprep.subr.mxu0 0.0
        %1653 = vmatpush1.xpose.msra.mxu0 %v1618
        %1654 = vmatprep.subr.mxu0 0.0
        %1655 = vmatpush2.xpose.msra.mxu0 0.0
        %1656 = vmatprep.subr.mxu0 0.0
        %1657 = vmatpush2.xpose.msra.mxu0 0.0
        %1658 = vmatprep.subr.mxu0 0.0
        %1659 = vmatpush2.xpose.msra.mxu0 0.0
        %1660 = vmatprep.subr.mxu0 0.0
        %1661 = vmatpush2.xpose.msra.mxu0 0.0
        %1662 = vmatprep.subr.mxu0 0.0
        %1663 = vmatpush2.xpose.msra.mxu0 0.0
        %1664 = vmatprep.subr.mxu0 0.0
        %1665 = vmatpush2.xpose.msra.mxu0 0.0
        %1666 = vmatprep.subr.mxu0 0.0
        %1667 = vmatpush2.xpose.msra.mxu0 0.0
        %1668 = vmatprep.subr.mxu0 0.0
        %1669 = vmatpush2.xpose.msra.mxu0 0.0
        %1670 = vmatprep.subr.mxu0 0.0
        %1671 = vmatpush2.xpose.msra.mxu0 0.0
        %1672 = vmatprep.subr.mxu0 0.0
        %1673 = vmatpush2.xpose.msra.mxu0 0.0
        %1674 = vmatprep.subr.mxu0 0.0
        %1675 = vmatpush2.xpose.msra.mxu0 0.0
        %1676 = vmatprep.subr.mxu0 0.0
        %1677 = vmatpush2.xpose.msra.mxu0 0.0
        %1678 = vmatprep.subr.mxu0 0.0
        %1679 = vmatpush2.xpose.msra.mxu0 0.0
        %1680 = vmatprep.subr.mxu0 0.0
        %1681 = vmatpush2.xpose.msra.mxu0 0.0
        %1682 = vmatprep.subr.mxu0 0.0
        %1683 = vmatpush2.xpose.msra.mxu0 0.0
        %1684 = vmatprep.subr.mxu0 0.0
        %1685 = vmatpush2.xpose.msra.mxu0 0.0
        %1686 = vmatprep.mubr.f32.mxu0 0.0
        %1687 = vmatmul.mubr.f32.gmra.mxu0 %v1614
        %v1688 = vpop.f32.mrf.mxu0
        %v1689 = vadd.f32 %v625, %v1688
        %v1690 = vpop.f32.mrf.mxu0
        %1691 = vmatprep.mubr.f32.mxu0 0.0
        %1692 = vmatmul.mubr.f32.gmra.mxu0 %v1616
        %v1693 = vpop.f32.mrf.mxu0
        %v1694 = vadd.f32 %v626, %v1693
        %v1695 = vpop.f32.mrf.mxu0
        %1696 = vdwg.mxu0
        %1697 = vrot.lane.b32.xlu0 %v613, 112
        %v1698 = vpop.permute.xlu0 %1697
        %1699 = vrot.lane.b32.xlu0 %v618, 112
        %v1700 = vpop.permute.xlu0 %1699
        %1701 = vrot.lane.b32.xlu0 %v613, 80
        %v1702 = vpop.permute.xlu0 %1701
        %1703 = vrot.lane.b32.xlu0 %v618, 80
        %v1704 = vpop.permute.xlu0 %1703
        %v1705 = vsel %vm635, %v1698, 0
        %v1707 = vsel %vm635, %v1700, 0
        %v1709 = vsel %vm635, %v1702, 0
        %v1711 = vsel %vm635, %v1704, 0
        %1713 = vmatprep.subr.mxu0 0.0
        %1714 = vmatpush1.xpose.msra.mxu0 0.0
        %1715 = vmatprep.subr.mxu0 0.0
        %1716 = vmatpush1.xpose.msra.mxu0 0.0
        %1717 = vmatprep.subr.mxu0 0.0
        %1718 = vmatpush1.xpose.msra.mxu0 0.0
        %1719 = vmatprep.subr.mxu0 0.0
        %1720 = vmatpush1.xpose.msra.mxu0 0.0
        %1721 = vmatprep.subr.mxu0 0.0
        %1722 = vmatpush1.xpose.msra.mxu0 0.0
        %1723 = vmatprep.subr.mxu0 0.0
        %1724 = vmatpush1.xpose.msra.mxu0 0.0
        %1725 = vmatprep.subr.mxu0 0.0
        %1726 = vmatpush1.xpose.msra.mxu0 0.0
        %1727 = vmatprep.subr.mxu0 0.0
        %1728 = vmatpush1.xpose.msra.mxu0 0.0
        %1729 = vmatprep.subr.mxu0 0.0
        %1730 = vmatpush1.xpose.msra.mxu0 0.0
        %1731 = vmatprep.subr.mxu0 0.0
        %1732 = vmatpush1.xpose.msra.mxu0 0.0
        %1733 = vmatprep.subr.mxu0 0.0
        %1734 = vmatpush1.xpose.msra.mxu0 0.0
        %1735 = vmatprep.subr.mxu0 0.0
        %1736 = vmatpush1.xpose.msra.mxu0 0.0
        %1737 = vmatprep.subr.mxu0 0.0
        %1738 = vmatpush1.xpose.msra.mxu0 0.0
        %1739 = vmatprep.subr.mxu0 0.0
        %1740 = vmatpush1.xpose.msra.mxu0 0.0
        %1741 = vmatprep.subr.mxu0 0.0
        %1742 = vmatpush1.xpose.msra.mxu0 %v1711
        %1743 = vmatprep.subr.mxu0 0.0
        %1744 = vmatpush1.xpose.msra.mxu0 %v1709
        %1745 = vmatprep.subr.mxu0 0.0
        %1746 = vmatpush2.xpose.msra.mxu0 0.0
        %1747 = vmatprep.subr.mxu0 0.0
        %1748 = vmatpush2.xpose.msra.mxu0 0.0
        %1749 = vmatprep.subr.mxu0 0.0
        %1750 = vmatpush2.xpose.msra.mxu0 0.0
        %1751 = vmatprep.subr.mxu0 0.0
        %1752 = vmatpush2.xpose.msra.mxu0 0.0
        %1753 = vmatprep.subr.mxu0 0.0
        %1754 = vmatpush2.xpose.msra.mxu0 0.0
        %1755 = vmatprep.subr.mxu0 0.0
        %1756 = vmatpush2.xpose.msra.mxu0 0.0
        %1757 = vmatprep.subr.mxu0 0.0
        %1758 = vmatpush2.xpose.msra.mxu0 0.0
        %1759 = vmatprep.subr.mxu0 0.0
        %1760 = vmatpush2.xpose.msra.mxu0 0.0
        %1761 = vmatprep.subr.mxu0 0.0
        %1762 = vmatpush2.xpose.msra.mxu0 0.0
        %1763 = vmatprep.subr.mxu0 0.0
        %1764 = vmatpush2.xpose.msra.mxu0 0.0
        %1765 = vmatprep.subr.mxu0 0.0
        %1766 = vmatpush2.xpose.msra.mxu0 0.0
        %1767 = vmatprep.subr.mxu0 0.0
        %1768 = vmatpush2.xpose.msra.mxu0 0.0
        %1769 = vmatprep.subr.mxu0 0.0
        %1770 = vmatpush2.xpose.msra.mxu0 0.0
        %1771 = vmatprep.subr.mxu0 0.0
        %1772 = vmatpush2.xpose.msra.mxu0 0.0
        %1773 = vmatprep.subr.mxu0 0.0
        %1774 = vmatpush2.xpose.msra.mxu0 0.0
        %1775 = vmatprep.subr.mxu0 0.0
        %1776 = vmatpush2.xpose.msra.mxu0 0.0
        %1777 = vmatprep.mubr.f32.mxu0 0.0
        %1778 = vmatmul.mubr.f32.gmra.mxu0 %v1705
        %v1779 = vpop.f32.mrf.mxu0
        %v1780 = vadd.f32 %v627, %v1779
        %v1781 = vpop.f32.mrf.mxu0
        %1782 = vmatprep.mubr.f32.mxu0 0.0
        %1783 = vmatmul.mubr.f32.gmra.mxu0 %v1707
        %v1784 = vpop.f32.mrf.mxu0
        %v1785 = vadd.f32 %v628, %v1784
        %v1786 = vpop.f32.mrf.mxu0
        %1787 = vdwg.mxu0
        %v1788 = vsel %vm635, %v1507, -inf
        %1789 = vmax.xlane.f32.xlu0 %v1788
        %v1790 = vpop.xlane.xlu0 %1789
        %v1791 = vsel %vm635, %v1512, -inf
        %1792 = vmax.xlane.f32.xlu0 %v1791
        %v1793 = vpop.xlane.xlu0 %1792
        %v1794 = vsel %vm635, %v1598, -inf
        %1795 = vmax.xlane.f32.xlu0 %v1794
        %v1796 = vpop.xlane.xlu0 %1795
        %v1797 = vsel %vm635, %v1603, -inf
        %1798 = vmax.xlane.f32.xlu0 %v1797
        %v1799 = vpop.xlane.xlu0 %1798
        %v1800 = vsel %vm635, %v1689, -inf
        %1801 = vmax.xlane.f32.xlu0 %v1800
        %v1802 = vpop.xlane.xlu0 %1801
        %v1803 = vsel %vm635, %v1694, -inf
        %1804 = vmax.xlane.f32.xlu0 %v1803
        %v1805 = vpop.xlane.xlu0 %1804
        %v1806 = vsel %vm635, %v1780, -inf
        %1807 = vmax.xlane.f32.xlu0 %v1806
        %v1808 = vpop.xlane.xlu0 %1807
        %v1809 = vsel %vm635, %v1785, -inf
        %1810 = vmax.xlane.f32.xlu0 %v1809
        %v1811 = vpop.xlane.xlu0 %1810
        %v1812 = vsub.f32 %v1507, %v1790
        %v1813 = vsub.f32 %v1512, %v1793
        %v1814 = vsub.f32 %v1598, %v1796
        %v1815 = vsub.f32 %v1603, %v1799
        %v1816 = vsub.f32 %v1689, %v1802
        %v1817 = vsub.f32 %v1694, %v1805
        %v1818 = vsub.f32 %v1780, %v1808
        %v1819 = vsub.f32 %v1785, %v1811
        %v1820 = vmul.f32 %v1812, 1.442695
        %v1821 = vpow.pop %v1820
        %v1822 = vmul.f32 %v1813, 1.442695
        %v1823 = vpow.pop %v1822
        %v1824 = vmul.f32 %v1814, 1.442695
        %v1825 = vpow.pop %v1824
        %v1826 = vmul.f32 %v1815, 1.442695
        %v1827 = vpow.pop %v1826
        %v1828 = vmul.f32 %v1816, 1.442695
        %v1829 = vpow.pop %v1828
        %v1830 = vmul.f32 %v1817, 1.442695
        %v1831 = vpow.pop %v1830
        %v1832 = vmul.f32 %v1818, 1.442695
        %v1833 = vpow.pop %v1832
        %v1834 = vmul.f32 %v1819, 1.442695
        %v1835 = vpow.pop %v1834
        %v1836 = vsel %vm635, %v1821, 0.0
        %1837 = vadd.xlane.f32.xlu0 %v1836
        %v1838 = vpop.xlane.xlu0 %1837
        %v1839 = vsel %vm635, %v1823, 0.0
        %1840 = vadd.xlane.f32.xlu0 %v1839
        %v1841 = vpop.xlane.xlu0 %1840
        %v1842 = vsel %vm635, %v1825, 0.0
        %1843 = vadd.xlane.f32.xlu0 %v1842
        %v1844 = vpop.xlane.xlu0 %1843
        %v1845 = vsel %vm635, %v1827, 0.0
        %1846 = vadd.xlane.f32.xlu0 %v1845
        %v1847 = vpop.xlane.xlu0 %1846
        %v1848 = vsel %vm635, %v1829, 0.0
        %1849 = vadd.xlane.f32.xlu0 %v1848
        %v1850 = vpop.xlane.xlu0 %1849
        %v1851 = vsel %vm635, %v1831, 0.0
        %1852 = vadd.xlane.f32.xlu0 %v1851
        %v1853 = vpop.xlane.xlu0 %1852
        %v1854 = vsel %vm635, %v1833, 0.0
        %1855 = vadd.xlane.f32.xlu0 %v1854
        %v1856 = vpop.xlane.xlu0 %1855
        %v1857 = vsel %vm635, %v1835, 0.0
        %1858 = vadd.xlane.f32.xlu0 %v1857
        %v1859 = vpop.xlane.xlu0 %1858
        %v1860 = vrcp.pop %v1838
        %v1861 = vrcp.pop %v1841
        %v1862 = vrcp.pop %v1844
        %v1863 = vrcp.pop %v1847
        %v1864 = vrcp.pop %v1850
        %v1865 = vrcp.pop %v1853
        %v1866 = vrcp.pop %v1856
        %v1867 = vrcp.pop %v1859
        %v1868 = vmul.f32 %v1821, %v1860
        %v1869 = vmul.f32 %v1823, %v1861
        %v1870 = vmul.f32 %v1825, %v1862
        %v1871 = vmul.f32 %v1827, %v1863
        %v1872 = vmul.f32 %v1829, %v1864
        %v1873 = vmul.f32 %v1831, %v1865
        %v1874 = vmul.f32 %v1833, %v1866
        %v1875 = vmul.f32 %v1835, %v1867
        %1876 = vrot.lane.b32.xlu0 %v583, 48
        %v1877 = vpop.permute.xlu0 %1876
        %1878 = vrot.lane.b32.xlu0 %v588, 48
        %v1879 = vpop.permute.xlu0 %1878
        %v1883 = vsel %vm635, %v1868, 0
        %v1886 = vsel %vm635, %v1869, 0
        %1888 = vmatprep.subr.mxu0 0.0
        %1889 = vmatpush1.msra.mxu0 0.0
        %1890 = vmatprep.subr.mxu0 0.0
        %1891 = vmatpush1.msra.mxu0 0.0
        %1892 = vmatprep.subr.mxu0 0.0
        %1893 = vmatpush1.msra.mxu0 0.0
        %1894 = vmatprep.subr.mxu0 0.0
        %1895 = vmatpush1.msra.mxu0 0.0
        %1896 = vmatprep.subr.mxu0 0.0
        %1897 = vmatpush1.msra.mxu0 0.0
        %1898 = vmatprep.subr.mxu0 0.0
        %1899 = vmatpush1.msra.mxu0 0.0
        %1900 = vmatprep.subr.mxu0 0.0
        %1901 = vmatpush1.msra.mxu0 0.0
        %1902 = vmatprep.subr.mxu0 0.0
        %1903 = vmatpush1.msra.mxu0 0.0
        %1904 = vmatprep.subr.mxu0 0.0
        %1905 = vmatpush1.msra.mxu0 0.0
        %1906 = vmatprep.subr.mxu0 0.0
        %1907 = vmatpush1.msra.mxu0 0.0
        %1908 = vmatprep.subr.mxu0 0.0
        %1909 = vmatpush1.msra.mxu0 0.0
        %1910 = vmatprep.subr.mxu0 0.0
        %1911 = vmatpush1.msra.mxu0 0.0
        %1912 = vmatprep.subr.mxu0 0.0
        %1913 = vmatpush1.msra.mxu0 0.0
        %1914 = vmatprep.subr.mxu0 0.0
        %1915 = vmatpush1.msra.mxu0 0.0
        %1916 = vmatprep.subr.mxu0 0.0
        %1917 = vmatpush1.msra.mxu0 %v1879
        %1918 = vmatprep.subr.mxu0 0.0
        %1919 = vmatpush1.msra.mxu0 %v1877
        %1920 = vmatprep.subr.mxu0 0.0
        %1921 = vmatpush2.msra.mxu0 0.0
        %1922 = vmatprep.subr.mxu0 0.0
        %1923 = vmatpush2.msra.mxu0 0.0
        %1924 = vmatprep.subr.mxu0 0.0
        %1925 = vmatpush2.msra.mxu0 0.0
        %1926 = vmatprep.subr.mxu0 0.0
        %1927 = vmatpush2.msra.mxu0 0.0
        %1928 = vmatprep.subr.mxu0 0.0
        %1929 = vmatpush2.msra.mxu0 0.0
        %1930 = vmatprep.subr.mxu0 0.0
        %1931 = vmatpush2.msra.mxu0 0.0
        %1932 = vmatprep.subr.mxu0 0.0
        %1933 = vmatpush2.msra.mxu0 0.0
        %1934 = vmatprep.subr.mxu0 0.0
        %1935 = vmatpush2.msra.mxu0 0.0
        %1936 = vmatprep.subr.mxu0 0.0
        %1937 = vmatpush2.msra.mxu0 0.0
        %1938 = vmatprep.subr.mxu0 0.0
        %1939 = vmatpush2.msra.mxu0 0.0
        %1940 = vmatprep.subr.mxu0 0.0
        %1941 = vmatpush2.msra.mxu0 0.0
        %1942 = vmatprep.subr.mxu0 0.0
        %1943 = vmatpush2.msra.mxu0 0.0
        %1944 = vmatprep.subr.mxu0 0.0
        %1945 = vmatpush2.msra.mxu0 0.0
        %1946 = vmatprep.subr.mxu0 0.0
        %1947 = vmatpush2.msra.mxu0 0.0
        %1948 = vmatprep.subr.mxu0 0.0
        %1949 = vmatpush2.msra.mxu0 0.0
        %1950 = vmatprep.subr.mxu0 0.0
        %1951 = vmatpush2.msra.mxu0 0.0
        %1952 = vmatprep.mubr.f32.mxu0 0.0
        %1953 = vmatmul.mubr.f32.gmra.mxu0 %v1883
        %v1954 = vpop.f32.mrf.mxu0
        %v1955 = vadd.f32 0.0, %v1954
        %v1956 = vpop.f32.mrf.mxu0
        %1957 = vmatprep.mubr.f32.mxu0 0.0
        %1958 = vmatmul.mubr.f32.gmra.mxu0 %v1886
        %v1959 = vpop.f32.mrf.mxu0
        %v1960 = vadd.f32 0.0, %v1959
        %v1961 = vpop.f32.mrf.mxu0
        %1962 = vdwg.mxu0
        %1963 = vrot.lane.b32.xlu0 %v593, 48
        %v1964 = vpop.permute.xlu0 %1963
        %1965 = vrot.lane.b32.xlu0 %v598, 48
        %v1966 = vpop.permute.xlu0 %1965
        %v1970 = vsel %vm635, %v1870, 0
        %v1973 = vsel %vm635, %v1871, 0
        %1975 = vmatprep.subr.mxu0 0.0
        %1976 = vmatpush1.msra.mxu0 0.0
        %1977 = vmatprep.subr.mxu0 0.0
        %1978 = vmatpush1.msra.mxu0 0.0
        %1979 = vmatprep.subr.mxu0 0.0
        %1980 = vmatpush1.msra.mxu0 0.0
        %1981 = vmatprep.subr.mxu0 0.0
        %1982 = vmatpush1.msra.mxu0 0.0
        %1983 = vmatprep.subr.mxu0 0.0
        %1984 = vmatpush1.msra.mxu0 0.0
        %1985 = vmatprep.subr.mxu0 0.0
        %1986 = vmatpush1.msra.mxu0 0.0
        %1987 = vmatprep.subr.mxu0 0.0
        %1988 = vmatpush1.msra.mxu0 0.0
        %1989 = vmatprep.subr.mxu0 0.0
        %1990 = vmatpush1.msra.mxu0 0.0
        %1991 = vmatprep.subr.mxu0 0.0
        %1992 = vmatpush1.msra.mxu0 0.0
        %1993 = vmatprep.subr.mxu0 0.0
        %1994 = vmatpush1.msra.mxu0 0.0
        %1995 = vmatprep.subr.mxu0 0.0
        %1996 = vmatpush1.msra.mxu0 0.0
        %1997 = vmatprep.subr.mxu0 0.0
        %1998 = vmatpush1.msra.mxu0 0.0
        %1999 = vmatprep.subr.mxu0 0.0
        %2000 = vmatpush1.msra.mxu0 0.0
        %2001 = vmatprep.subr.mxu0 0.0
        %2002 = vmatpush1.msra.mxu0 0.0
        %2003 = vmatprep.subr.mxu0 0.0
        %2004 = vmatpush1.msra.mxu0 %v1966
        %2005 = vmatprep.subr.mxu0 0.0
        %2006 = vmatpush1.msra.mxu0 %v1964
        %2007 = vmatprep.subr.mxu0 0.0
        %2008 = vmatpush2.msra.mxu0 0.0
        %2009 = vmatprep.subr.mxu0 0.0
        %2010 = vmatpush2.msra.mxu0 0.0
        %2011 = vmatprep.subr.mxu0 0.0
        %2012 = vmatpush2.msra.mxu0 0.0
        %2013 = vmatprep.subr.mxu0 0.0
        %2014 = vmatpush2.msra.mxu0 0.0
        %2015 = vmatprep.subr.mxu0 0.0
        %2016 = vmatpush2.msra.mxu0 0.0
        %2017 = vmatprep.subr.mxu0 0.0
        %2018 = vmatpush2.msra.mxu0 0.0
        %2019 = vmatprep.subr.mxu0 0.0
        %2020 = vmatpush2.msra.mxu0 0.0
        %2021 = vmatprep.subr.mxu0 0.0
        %2022 = vmatpush2.msra.mxu0 0.0
        %2023 = vmatprep.subr.mxu0 0.0
        %2024 = vmatpush2.msra.mxu0 0.0
        %2025 = vmatprep.subr.mxu0 0.0
        %2026 = vmatpush2.msra.mxu0 0.0
        %2027 = vmatprep.subr.mxu0 0.0
        %2028 = vmatpush2.msra.mxu0 0.0
        %2029 = vmatprep.subr.mxu0 0.0
        %2030 = vmatpush2.msra.mxu0 0.0
        %2031 = vmatprep.subr.mxu0 0.0
        %2032 = vmatpush2.msra.mxu0 0.0
        %2033 = vmatprep.subr.mxu0 0.0
        %2034 = vmatpush2.msra.mxu0 0.0
        %2035 = vmatprep.subr.mxu0 0.0
        %2036 = vmatpush2.msra.mxu0 0.0
        %2037 = vmatprep.subr.mxu0 0.0
        %2038 = vmatpush2.msra.mxu0 0.0
        %2039 = vmatprep.mubr.f32.mxu0 0.0
        %2040 = vmatmul.mubr.f32.gmra.mxu0 %v1970
        %v2041 = vpop.f32.mrf.mxu0
        %v2042 = vadd.f32 0.0, %v2041
        %v2043 = vpop.f32.mrf.mxu0
        %2044 = vmatprep.mubr.f32.mxu0 0.0
        %2045 = vmatmul.mubr.f32.gmra.mxu0 %v1973
        %v2046 = vpop.f32.mrf.mxu0
        %v2047 = vadd.f32 0.0, %v2046
        %v2048 = vpop.f32.mrf.mxu0
        %2049 = vdwg.mxu0
        %2050 = vrot.lane.b32.xlu0 %v603, 48
        %v2051 = vpop.permute.xlu0 %2050
        %2052 = vrot.lane.b32.xlu0 %v608, 48
        %v2053 = vpop.permute.xlu0 %2052
        %v2057 = vsel %vm635, %v1872, 0
        %v2060 = vsel %vm635, %v1873, 0
        %2062 = vmatprep.subr.mxu0 0.0
        %2063 = vmatpush1.msra.mxu0 0.0
        %2064 = vmatprep.subr.mxu0 0.0
        %2065 = vmatpush1.msra.mxu0 0.0
        %2066 = vmatprep.subr.mxu0 0.0
        %2067 = vmatpush1.msra.mxu0 0.0
        %2068 = vmatprep.subr.mxu0 0.0
        %2069 = vmatpush1.msra.mxu0 0.0
        %2070 = vmatprep.subr.mxu0 0.0
        %2071 = vmatpush1.msra.mxu0 0.0
        %2072 = vmatprep.subr.mxu0 0.0
        %2073 = vmatpush1.msra.mxu0 0.0
        %2074 = vmatprep.subr.mxu0 0.0
        %2075 = vmatpush1.msra.mxu0 0.0
        %2076 = vmatprep.subr.mxu0 0.0
        %2077 = vmatpush1.msra.mxu0 0.0
        %2078 = vmatprep.subr.mxu0 0.0
        %2079 = vmatpush1.msra.mxu0 0.0
        %2080 = vmatprep.subr.mxu0 0.0
        %2081 = vmatpush1.msra.mxu0 0.0
        %2082 = vmatprep.subr.mxu0 0.0
        %2083 = vmatpush1.msra.mxu0 0.0
        %2084 = vmatprep.subr.mxu0 0.0
        %2085 = vmatpush1.msra.mxu0 0.0
        %2086 = vmatprep.subr.mxu0 0.0
        %2087 = vmatpush1.msra.mxu0 0.0
        %2088 = vmatprep.subr.mxu0 0.0
        %2089 = vmatpush1.msra.mxu0 0.0
        %2090 = vmatprep.subr.mxu0 0.0
        %2091 = vmatpush1.msra.mxu0 %v2053
        %2092 = vmatprep.subr.mxu0 0.0
        %2093 = vmatpush1.msra.mxu0 %v2051
        %2094 = vmatprep.subr.mxu0 0.0
        %2095 = vmatpush2.msra.mxu0 0.0
        %2096 = vmatprep.subr.mxu0 0.0
        %2097 = vmatpush2.msra.mxu0 0.0
        %2098 = vmatprep.subr.mxu0 0.0
        %2099 = vmatpush2.msra.mxu0 0.0
        %2100 = vmatprep.subr.mxu0 0.0
        %2101 = vmatpush2.msra.mxu0 0.0
        %2102 = vmatprep.subr.mxu0 0.0
        %2103 = vmatpush2.msra.mxu0 0.0
        %2104 = vmatprep.subr.mxu0 0.0
        %2105 = vmatpush2.msra.mxu0 0.0
        %2106 = vmatprep.subr.mxu0 0.0
        %2107 = vmatpush2.msra.mxu0 0.0
        %2108 = vmatprep.subr.mxu0 0.0
        %2109 = vmatpush2.msra.mxu0 0.0
        %2110 = vmatprep.subr.mxu0 0.0
        %2111 = vmatpush2.msra.mxu0 0.0
        %2112 = vmatprep.subr.mxu0 0.0
        %2113 = vmatpush2.msra.mxu0 0.0
        %2114 = vmatprep.subr.mxu0 0.0
        %2115 = vmatpush2.msra.mxu0 0.0
        %2116 = vmatprep.subr.mxu0 0.0
        %2117 = vmatpush2.msra.mxu0 0.0
        %2118 = vmatprep.subr.mxu0 0.0
        %2119 = vmatpush2.msra.mxu0 0.0
        %2120 = vmatprep.subr.mxu0 0.0
        %2121 = vmatpush2.msra.mxu0 0.0
        %2122 = vmatprep.subr.mxu0 0.0
        %2123 = vmatpush2.msra.mxu0 0.0
        %2124 = vmatprep.subr.mxu0 0.0
        %2125 = vmatpush2.msra.mxu0 0.0
        %2126 = vmatprep.mubr.f32.mxu0 0.0
        %2127 = vmatmul.mubr.f32.gmra.mxu0 %v2057
        %v2128 = vpop.f32.mrf.mxu0
        %v2129 = vadd.f32 0.0, %v2128
        %v2130 = vpop.f32.mrf.mxu0
        %2131 = vmatprep.mubr.f32.mxu0 0.0
        %2132 = vmatmul.mubr.f32.gmra.mxu0 %v2060
        %v2133 = vpop.f32.mrf.mxu0
        %v2134 = vadd.f32 0.0, %v2133
        %v2135 = vpop.f32.mrf.mxu0
        %2136 = vdwg.mxu0
        %2137 = vrot.lane.b32.xlu0 %v613, 48
        %v2138 = vpop.permute.xlu0 %2137
        %2139 = vrot.lane.b32.xlu0 %v618, 48
        %v2140 = vpop.permute.xlu0 %2139
        %v2144 = vsel %vm635, %v1874, 0
        %v2147 = vsel %vm635, %v1875, 0
        %2149 = vmatprep.subr.mxu0 0.0
        %2150 = vmatpush1.msra.mxu0 0.0
        %2151 = vmatprep.subr.mxu0 0.0
        %2152 = vmatpush1.msra.mxu0 0.0
        %2153 = vmatprep.subr.mxu0 0.0
        %2154 = vmatpush1.msra.mxu0 0.0
        %2155 = vmatprep.subr.mxu0 0.0
        %2156 = vmatpush1.msra.mxu0 0.0
        %2157 = vmatprep.subr.mxu0 0.0
        %2158 = vmatpush1.msra.mxu0 0.0
        %2159 = vmatprep.subr.mxu0 0.0
        %2160 = vmatpush1.msra.mxu0 0.0
        %2161 = vmatprep.subr.mxu0 0.0
        %2162 = vmatpush1.msra.mxu0 0.0
        %2163 = vmatprep.subr.mxu0 0.0
        %2164 = vmatpush1.msra.mxu0 0.0
        %2165 = vmatprep.subr.mxu0 0.0
        %2166 = vmatpush1.msra.mxu0 0.0
        %2167 = vmatprep.subr.mxu0 0.0
        %2168 = vmatpush1.msra.mxu0 0.0
        %2169 = vmatprep.subr.mxu0 0.0
        %2170 = vmatpush1.msra.mxu0 0.0
        %2171 = vmatprep.subr.mxu0 0.0
        %2172 = vmatpush1.msra.mxu0 0.0
        %2173 = vmatprep.subr.mxu0 0.0
        %2174 = vmatpush1.msra.mxu0 0.0
        %2175 = vmatprep.subr.mxu0 0.0
        %2176 = vmatpush1.msra.mxu0 0.0
        %2177 = vmatprep.subr.mxu0 0.0
        %2178 = vmatpush1.msra.mxu0 %v2140
        %2179 = vmatprep.subr.mxu0 0.0
        %2180 = vmatpush1.msra.mxu0 %v2138
        %2181 = vmatprep.subr.mxu0 0.0
        %2182 = vmatpush2.msra.mxu0 0.0
        %2183 = vmatprep.subr.mxu0 0.0
        %2184 = vmatpush2.msra.mxu0 0.0
        %2185 = vmatprep.subr.mxu0 0.0
        %2186 = vmatpush2.msra.mxu0 0.0
        %2187 = vmatprep.subr.mxu0 0.0
        %2188 = vmatpush2.msra.mxu0 0.0
        %2189 = vmatprep.subr.mxu0 0.0
        %2190 = vmatpush2.msra.mxu0 0.0
        %2191 = vmatprep.subr.mxu0 0.0
        %2192 = vmatpush2.msra.mxu0 0.0
        %2193 = vmatprep.subr.mxu0 0.0
        %2194 = vmatpush2.msra.mxu0 0.0
        %2195 = vmatprep.subr.mxu0 0.0
        %2196 = vmatpush2.msra.mxu0 0.0
        %2197 = vmatprep.subr.mxu0 0.0
        %2198 = vmatpush2.msra.mxu0 0.0
        %2199 = vmatprep.subr.mxu0 0.0
        %2200 = vmatpush2.msra.mxu0 0.0
        %2201 = vmatprep.subr.mxu0 0.0
        %2202 = vmatpush2.msra.mxu0 0.0
        %2203 = vmatprep.subr.mxu0 0.0
        %2204 = vmatpush2.msra.mxu0 0.0
        %2205 = vmatprep.subr.mxu0 0.0
        %2206 = vmatpush2.msra.mxu0 0.0
        %2207 = vmatprep.subr.mxu0 0.0
        %2208 = vmatpush2.msra.mxu0 0.0
        %2209 = vmatprep.subr.mxu0 0.0
        %2210 = vmatpush2.msra.mxu0 0.0
        %2211 = vmatprep.subr.mxu0 0.0
        %2212 = vmatpush2.msra.mxu0 0.0
        %2213 = vmatprep.mubr.f32.mxu0 0.0
        %2214 = vmatmul.mubr.f32.gmra.mxu0 %v2144
        %v2215 = vpop.f32.mrf.mxu0
        %v2216 = vadd.f32 0.0, %v2215
        %v2217 = vpop.f32.mrf.mxu0
        %2218 = vmatprep.mubr.f32.mxu0 0.0
        %2219 = vmatmul.mubr.f32.gmra.mxu0 %v2147
        %v2220 = vpop.f32.mrf.mxu0
        %v2221 = vadd.f32 0.0, %v2220
        %v2222 = vpop.f32.mrf.mxu0
        %2223 = vdwg.mxu0
        %s2224 = scalar_lea.vmem [#allocation8], 16
        %v2225 = vld [vmem:[%s2224] sm:$0xff]
        %v2226 = vld [vmem:[%s2224 + $0x8] sm:$0xff]
        %v2228 = vsel %vm635, %v1955, 0
        %v2231 = vsel %vm635, %v1960, 0
        %v2234 = vsel %vm635, %v2042, 0
        %v2237 = vsel %vm635, %v2047, 0
        %v2240 = vsel %vm635, %v2129, 0
        %v2243 = vsel %vm635, %v2134, 0
        %v2246 = vsel %vm635, %v2216, 0
        %v2249 = vsel %vm635, %v2221, 0
        %2251 = vmatprep.subr.mxu0 0.0
        %2252 = vmatpush1.msra.mxu0 0.0
        %2253 = vmatprep.subr.mxu0 0.0
        %2254 = vmatpush1.msra.mxu0 0.0
        %2255 = vmatprep.subr.mxu0 0.0
        %2256 = vmatpush1.msra.mxu0 0.0
        %2257 = vmatprep.subr.mxu0 0.0
        %2258 = vmatpush1.msra.mxu0 0.0
        %2259 = vmatprep.subr.mxu0 0.0
        %2260 = vmatpush1.msra.mxu0 0.0
        %2261 = vmatprep.subr.mxu0 0.0
        %2262 = vmatpush1.msra.mxu0 0.0
        %2263 = vmatprep.subr.mxu0 0.0
        %2264 = vmatpush1.msra.mxu0 0.0
        %2265 = vmatprep.subr.mxu0 0.0
        %2266 = vmatpush1.msra.mxu0 0.0
        %2267 = vmatprep.subr.mxu0 0.0
        %2268 = vmatpush1.msra.mxu0 0.0
        %2269 = vmatprep.subr.mxu0 0.0
        %2270 = vmatpush1.msra.mxu0 0.0
        %2271 = vmatprep.subr.mxu0 0.0
        %2272 = vmatpush1.msra.mxu0 0.0
        %2273 = vmatprep.subr.mxu0 0.0
        %2274 = vmatpush1.msra.mxu0 0.0
        %2275 = vmatprep.subr.mxu0 0.0
        %2276 = vmatpush1.msra.mxu0 0.0
        %2277 = vmatprep.subr.mxu0 0.0
        %2278 = vmatpush1.msra.mxu0 0.0
        %2279 = vmatprep.subr.mxu0 0.0
        %2280 = vmatpush1.msra.mxu0 %v2226
        %2281 = vmatprep.subr.mxu0 0.0
        %2282 = vmatpush1.msra.mxu0 %v2225
        %2283 = vmatprep.subr.mxu0 0.0
        %2284 = vmatpush2.msra.mxu0 0.0
        %2285 = vmatprep.subr.mxu0 0.0
        %2286 = vmatpush2.msra.mxu0 0.0
        %2287 = vmatprep.subr.mxu0 0.0
        %2288 = vmatpush2.msra.mxu0 0.0
        %2289 = vmatprep.subr.mxu0 0.0
        %2290 = vmatpush2.msra.mxu0 0.0
        %2291 = vmatprep.subr.mxu0 0.0
        %2292 = vmatpush2.msra.mxu0 0.0
        %2293 = vmatprep.subr.mxu0 0.0
        %2294 = vmatpush2.msra.mxu0 0.0
        %2295 = vmatprep.subr.mxu0 0.0
        %2296 = vmatpush2.msra.mxu0 0.0
        %2297 = vmatprep.subr.mxu0 0.0
        %2298 = vmatpush2.msra.mxu0 0.0
        %2299 = vmatprep.subr.mxu0 0.0
        %2300 = vmatpush2.msra.mxu0 0.0
        %2301 = vmatprep.subr.mxu0 0.0
        %2302 = vmatpush2.msra.mxu0 0.0
        %2303 = vmatprep.subr.mxu0 0.0
        %2304 = vmatpush2.msra.mxu0 0.0
        %2305 = vmatprep.subr.mxu0 0.0
        %2306 = vmatpush2.msra.mxu0 0.0
        %2307 = vmatprep.subr.mxu0 0.0
        %2308 = vmatpush2.msra.mxu0 0.0
        %2309 = vmatprep.subr.mxu0 0.0
        %2310 = vmatpush2.msra.mxu0 0.0
        %2311 = vmatprep.subr.mxu0 0.0
        %2312 = vmatpush2.msra.mxu0 0.0
        %2313 = vmatprep.subr.mxu0 0.0
        %2314 = vmatpush2.msra.mxu0 0.0
        %2315 = vmatprep.mubr.f32.mxu0 0.0
        %2316 = vmatmul.mubr.f32.gmra.mxu0 %v2228
        %v2317 = vpop.f32.mrf.mxu0
        %v2318 = vadd.f32 0.0, %v2317
        %v2319 = vpop.f32.mrf.mxu0
        %2320 = vmatprep.mubr.f32.mxu0 0.0
        %2321 = vmatmul.mubr.f32.gmra.mxu0 %v2231
        %v2322 = vpop.f32.mrf.mxu0
        %v2323 = vadd.f32 0.0, %v2322
        %v2324 = vpop.f32.mrf.mxu0
        %2325 = vmatprep.mubr.f32.mxu0 0.0
        %2326 = vmatmul.mubr.f32.gmra.mxu0 %v2234
        %v2327 = vpop.f32.mrf.mxu0
        %v2328 = vadd.f32 0.0, %v2327
        %v2329 = vpop.f32.mrf.mxu0
        %2330 = vmatprep.mubr.f32.mxu0 0.0
        %2331 = vmatmul.mubr.f32.gmra.mxu0 %v2237
        %v2332 = vpop.f32.mrf.mxu0
        %v2333 = vadd.f32 0.0, %v2332
        %v2334 = vpop.f32.mrf.mxu0
        %2335 = vmatprep.mubr.f32.mxu0 0.0
        %2336 = vmatmul.mubr.f32.gmra.mxu0 %v2240
        %v2337 = vpop.f32.mrf.mxu0
        %v2338 = vadd.f32 0.0, %v2337
        %v2339 = vpop.f32.mrf.mxu0
        %2340 = vmatprep.mubr.f32.mxu0 0.0
        %2341 = vmatmul.mubr.f32.gmra.mxu0 %v2243
        %v2342 = vpop.f32.mrf.mxu0
        %v2343 = vadd.f32 0.0, %v2342
        %v2344 = vpop.f32.mrf.mxu0
        %2345 = vmatprep.mubr.f32.mxu0 0.0
        %2346 = vmatmul.mubr.f32.gmra.mxu0 %v2246
        %v2347 = vpop.f32.mrf.mxu0
        %v2348 = vadd.f32 0.0, %v2347
        %v2349 = vpop.f32.mrf.mxu0
        %2350 = vmatprep.mubr.f32.mxu0 0.0
        %2351 = vmatmul.mubr.f32.gmra.mxu0 %v2249
        %v2352 = vpop.f32.mrf.mxu0
        %v2353 = vadd.f32 0.0, %v2352
        %v2354 = vpop.f32.mrf.mxu0
        %2355 = vdwg.mxu0
        %v2357 = vsel %vm635, %v1153, 0
        %v2360 = vsel %vm635, %v1158, 0
        %v2363 = vsel %vm635, %v1240, 0
        %v2366 = vsel %vm635, %v1245, 0
        %v2369 = vsel %vm635, %v1327, 0
        %v2372 = vsel %vm635, %v1332, 0
        %v2375 = vsel %vm635, %v1414, 0
        %v2378 = vsel %vm635, %v1419, 0
        %2380 = vmatprep.subr.mxu0 0.0
        %2381 = vmatpush1.msra.mxu0 0.0
        %2382 = vmatprep.subr.mxu0 0.0
        %2383 = vmatpush1.msra.mxu0 0.0
        %2384 = vmatprep.subr.mxu0 0.0
        %2385 = vmatpush1.msra.mxu0 0.0
        %2386 = vmatprep.subr.mxu0 0.0
        %2387 = vmatpush1.msra.mxu0 0.0
        %2388 = vmatprep.subr.mxu0 0.0
        %2389 = vmatpush1.msra.mxu0 0.0
        %2390 = vmatprep.subr.mxu0 0.0
        %2391 = vmatpush1.msra.mxu0 0.0
        %2392 = vmatprep.subr.mxu0 0.0
        %2393 = vmatpush1.msra.mxu0 0.0
        %2394 = vmatprep.subr.mxu0 0.0
        %2395 = vmatpush1.msra.mxu0 0.0
        %2396 = vmatprep.subr.mxu0 0.0
        %2397 = vmatpush1.msra.mxu0 0.0
        %2398 = vmatprep.subr.mxu0 0.0
        %2399 = vmatpush1.msra.mxu0 0.0
        %2400 = vmatprep.subr.mxu0 0.0
        %2401 = vmatpush1.msra.mxu0 0.0
        %2402 = vmatprep.subr.mxu0 0.0
        %2403 = vmatpush1.msra.mxu0 0.0
        %2404 = vmatprep.subr.mxu0 0.0
        %2405 = vmatpush1.msra.mxu0 0.0
        %2406 = vmatprep.subr.mxu0 0.0
        %2407 = vmatpush1.msra.mxu0 0.0
        %2408 = vmatprep.subr.mxu0 0.0
        %2409 = vmatpush1.msra.mxu0 %v1423
        %2410 = vmatprep.subr.mxu0 0.0
        %2411 = vmatpush1.msra.mxu0 %v1422
        %2412 = vmatprep.subr.mxu0 0.0
        %2413 = vmatpush2.msra.mxu0 0.0
        %2414 = vmatprep.subr.mxu0 0.0
        %2415 = vmatpush2.msra.mxu0 0.0
        %2416 = vmatprep.subr.mxu0 0.0
        %2417 = vmatpush2.msra.mxu0 0.0
        %2418 = vmatprep.subr.mxu0 0.0
        %2419 = vmatpush2.msra.mxu0 0.0
        %2420 = vmatprep.subr.mxu0 0.0
        %2421 = vmatpush2.msra.mxu0 0.0
        %2422 = vmatprep.subr.mxu0 0.0
        %2423 = vmatpush2.msra.mxu0 0.0
        %2424 = vmatprep.subr.mxu0 0.0
        %2425 = vmatpush2.msra.mxu0 0.0
        %2426 = vmatprep.subr.mxu0 0.0
        %2427 = vmatpush2.msra.mxu0 0.0
        %2428 = vmatprep.subr.mxu0 0.0
        %2429 = vmatpush2.msra.mxu0 0.0
        %2430 = vmatprep.subr.mxu0 0.0
        %2431 = vmatpush2.msra.mxu0 0.0
        %2432 = vmatprep.subr.mxu0 0.0
        %2433 = vmatpush2.msra.mxu0 0.0
        %2434 = vmatprep.subr.mxu0 0.0
        %2435 = vmatpush2.msra.mxu0 0.0
        %2436 = vmatprep.subr.mxu0 0.0
        %2437 = vmatpush2.msra.mxu0 0.0
        %2438 = vmatprep.subr.mxu0 0.0
        %2439 = vmatpush2.msra.mxu0 0.0
        %2440 = vmatprep.subr.mxu0 0.0
        %2441 = vmatpush2.msra.mxu0 0.0
        %2442 = vmatprep.subr.mxu0 0.0
        %2443 = vmatpush2.msra.mxu0 0.0
        %2444 = vmatprep.mubr.f32.mxu0 0.0
        %2445 = vmatmul.mubr.f32.gmra.mxu0 %v2357
        %v2446 = vpop.f32.mrf.mxu0
        %v2447 = vadd.f32 %v2318, %v2446
        %v2448 = vpop.f32.mrf.mxu0
        %2449 = vmatprep.mubr.f32.mxu0 0.0
        %2450 = vmatmul.mubr.f32.gmra.mxu0 %v2360
        %v2451 = vpop.f32.mrf.mxu0
        %v2452 = vadd.f32 %v2323, %v2451
        %v2453 = vpop.f32.mrf.mxu0
        %2454 = vmatprep.mubr.f32.mxu0 0.0
        %2455 = vmatmul.mubr.f32.gmra.mxu0 %v2363
        %v2456 = vpop.f32.mrf.mxu0
        %v2457 = vadd.f32 %v2328, %v2456
        %v2458 = vpop.f32.mrf.mxu0
        %2459 = vmatprep.mubr.f32.mxu0 0.0
        %2460 = vmatmul.mubr.f32.gmra.mxu0 %v2366
        %v2461 = vpop.f32.mrf.mxu0
        %v2462 = vadd.f32 %v2333, %v2461
        %v2463 = vpop.f32.mrf.mxu0
        %2464 = vmatprep.mubr.f32.mxu0 0.0
        %2465 = vmatmul.mubr.f32.gmra.mxu0 %v2369
        %v2466 = vpop.f32.mrf.mxu0
        %v2467 = vadd.f32 %v2338, %v2466
        %v2468 = vpop.f32.mrf.mxu0
        %2469 = vmatprep.mubr.f32.mxu0 0.0
        %2470 = vmatmul.mubr.f32.gmra.mxu0 %v2372
        %v2471 = vpop.f32.mrf.mxu0
        %v2472 = vadd.f32 %v2343, %v2471
        %v2473 = vpop.f32.mrf.mxu0
        %2474 = vmatprep.mubr.f32.mxu0 0.0
        %2475 = vmatmul.mubr.f32.gmra.mxu0 %v2375
        %v2476 = vpop.f32.mrf.mxu0
        %v2477 = vadd.f32 %v2348, %v2476
        %v2478 = vpop.f32.mrf.mxu0
        %2479 = vmatprep.mubr.f32.mxu0 0.0
        %2480 = vmatmul.mubr.f32.gmra.mxu0 %v2378
        %v2481 = vpop.f32.mrf.mxu0
        %v2482 = vadd.f32 %v2353, %v2481
        %v2483 = vpop.f32.mrf.mxu0
        %2484 = vdwg.mxu0
        %v2485 = vld [vmem:[%s6] sm:$0x1]
        %v2487 = vlaneseq
        %v2488 = vshrl.u32 %v2487, 7
        %v2489 = vsub.s32 0, %v2488
        %v2490 = vrot.slane %v2485, %v2489
        %v2492 = vadd.f32 %v2447, %v2490
        %v2493 = vadd.f32 %v2452, %v2490
        %v2494 = vadd.f32 %v2457, %v2490
        %v2495 = vadd.f32 %v2462, %v2490
        %v2496 = vadd.f32 %v2467, %v2490
        %v2497 = vadd.f32 %v2472, %v2490
        %v2498 = vadd.f32 %v2477, %v2490
        %v2499 = vadd.f32 %v2482, %v2490
        %v2500 = vadd.f32 %v2492, %v344
        %v2501 = vadd.f32 %v2493, %v345
        %v2502 = vadd.f32 %v2494, %v346
        %v2503 = vadd.f32 %v2495, %v347
        %v2504 = vadd.f32 %v2496, %v348
        %v2505 = vadd.f32 %v2497, %v349
        %v2506 = vadd.f32 %v2498, %v350
        %v2507 = vadd.f32 %v2499, %v351
        %2508 = vst.msk [vmem:[%s341] sm:$0xff] %vm354, %v2500
        %2509 = vst.msk [vmem:[%s341 + $0x8] sm:$0xff] %vm354, %v2501
        %2510 = vst.msk [vmem:[%s341 + $0x10] sm:$0xff] %vm354, %v2502
        %2511 = vst.msk [vmem:[%s341 + $0x18] sm:$0xff] %vm354, %v2503
        %2512 = vst.msk [vmem:[%s341 + $0x20] sm:$0xff] %vm354, %v2504
        %2513 = vst.msk [vmem:[%s341 + $0x28] sm:$0xff] %vm354, %v2505
        %2514 = vst.msk [vmem:[%s341 + $0x30] sm:$0xff] %vm354, %v2506
        %2515 = vst.msk [vmem:[%s341 + $0x38] sm:$0xff] %vm354, %v2507
        %s2516 = sand.u32 %s186, 1
        %s2517 = scalar_lea.sflag [#allocation4], %s2516
        %s2518 = sand.u32 %s186, 1
        %s2519 = smul.addr %s2518, 64
        %s2520 = scalar_lea.vmem [#allocation10], %s2519
        // Predicated region
        $region65: #{tpu_custom_call.1} parent=47 // pred_check
          %p2521 = pneg %p196
        $region66: #{tpu_custom_call.1} parent=47 // pred_check_branch
          %2523 = sbr.rel (%p2521) target = $region68
        $region67: #{tpu_custom_call.1} parent=47 // pred_region
          %s2524 = smul.u32 4, %s26
          %s2526 = ssub.s32 1024, 1024
          %2527 = vsyncadd %s2517, %s2526
          %s2528 = smul.addr %s2524, 2
          %s2529 = smul.addr %s2528, 128
          %s2530 = scalar_lea.hbm %s7, %s2529
          %s2531 = sshll.u32 %s2520, 4
          %s2532 = int_to_ptr.vmem [resolvable:$true] %s2531
          %2537 = dma.vmem_to_hbm [thread:$0]  %s2532, 1024, %s2530, %s2517, 128, 128, 8
        $region68: #{tpu_custom_call.1} parent=47 // pred_fallthru
          _
      $region48: #{tpu_custom_call.1} parent=5 // pred_fallthru
        _
      %p2538 = scmp.le.s32.totalorder 2, %s21
      // Predicated region
      $region69: #{tpu_custom_call.1} parent=5 // pred_check
        %p2539 = pneg %p2538
      $region70: #{tpu_custom_call.1} parent=5 // pred_check_branch
        %2541 = sbr.rel (%p2539) target = $region72
      $region71: #{tpu_custom_call.1} parent=5 // pred_region
        %s2542 = ssub.s32 %s21, 2
        // Predicated region
        $region73: #{tpu_custom_call.1} parent=71 // pred_check
          %p2543 = pneg %p202
        $region74: #{tpu_custom_call.1} parent=71 // pred_check_branch
          %2545 = sbr.rel (%p2543) target = $region76
        $region75: #{tpu_custom_call.1} parent=71 // pred_region
          %s2546 = sand.u32 %s187, 1
          %s2547 = scalar_lea.sflag [#allocation4], %s2546
          %s2548 = sand.u32 %s187, 1
          %s2549 = smul.addr %s2548, 64
          %s2550 = scalar_lea.vmem [#allocation10], %s2549
          %2551 = dma.done %s2547, 1024
        $region76: #{tpu_custom_call.1} parent=71 // pred_fallthru
          _
      $region72: #{tpu_custom_call.1} parent=5 // pred_fallthru
        _
    $region6: #{tpu_custom_call.1} parent=1 // loop_footer
      %s25 = sadd.s32 1, %s21
    $region7: #{tpu_custom_call.1} parent=1 // loop_footer_branch
      %20 = sbr.rel target = $region3
    $region8: #{tpu_custom_call.1} parent=1 // loop_exit
      _
    %2552 = vsyncpa [#allocation3], 1
    %s2553 = scalar_lea.sflag [#allocation3], 1
    %2554 = vsyncpa %s2553, 1
    %2555 = vsyncpa [#allocation6], 1
    %2556 = vsyncpa [#allocation9], 1
    %2557 = vsyncpa [#allocation4], 1
    %s2558 = scalar_lea.sflag [#allocation4], 1
    %2559 = vsyncpa %s2558, 1

</llo_original>
